<compile_context>
chip_gen: v7x
topology: tpu7x:2x2x1
jax: 0.10.0
libtpu: 0.0.40
codegen_flags: <defaults>
</compile_context>

<pallas_src>
import functools

import jax
import jax.numpy as jnp
from jax.experimental import pallas as pl
from jax.experimental.pallas import tpu as pltpu


def _round_up(x, m):
    return (x + m - 1) // m * m


def stock_lstm_kernel(x_ref, cat_ref, w_ref, fc_ref, out_ref, *, B, T, I, H, C):
    """x_ref: [B,T,I]; cat_ref: [B,C]; w_ref: [202,4H] packed LSTM slab;
    fc_ref: [H+C+3, 64] packed FC slab; out_ref: [B,1]."""
    # Static row offsets into the packed LSTM slab.
    off_hh0 = _round_up(I, 8)
    off_ih1 = off_hh0 + H
    off_hh1 = off_ih1 + H
    off_b0 = off_hh1 + H
    off_b1 = off_b0 + 1

    wih0 = w_ref[0:I, :]                        # [I, 4H]
    whh0 = w_ref[off_hh0:off_hh0 + H, :]        # [H, 4H]
    wih1 = w_ref[off_ih1:off_ih1 + H, :]        # [H, 4H]
    whh1 = w_ref[off_hh1:off_hh1 + H, :]        # [H, 4H]
    b0 = w_ref[off_b0:off_b0 + 1, :]            # [1, 4H]  (b_ih + b_hh, g-scaled)
    b1 = w_ref[off_b1:off_b1 + 1, :]            # [1, 4H]

    def gates(pre):
        # g-gate columns were pre-scaled by 2 in packing, so a single sigmoid
        # over the whole [B, 4H] block + "2*s - 1" on the g slice reproduces
        # PyTorch's sigmoid/sigmoid/tanh/sigmoid exactly: tanh(x) = 2*sigmoid(2x) - 1.
        s = jax.nn.sigmoid(pre)
        i_g = s[:, 0 * H:1 * H]
        f_g = s[:, 1 * H:2 * H]
        g_g = 2.0 * s[:, 2 * H:3 * H] - 1.0
        o_g = s[:, 3 * H:4 * H]
        return i_g, f_g, g_g, o_g

    # ---- time-major input matrix, rows ordered (t, b) ----
    x = x_ref[...]                                                  # [B, T, I]
    x_tm = jnp.concatenate([x[:, t, :] for t in range(T)], axis=0)  # [T*B, I]

    # ---- layer 0: batched ih projection + bias, off the recurrent chain ----
    g0_all = jnp.dot(x_tm, wih0, preferred_element_type=jnp.float32) + b0

    h = jnp.zeros((B, H), jnp.float32)
    c = jnp.zeros((B, H), jnp.float32)
    h0_steps = []
    for t in range(T):
        pre = g0_all[t * B:(t + 1) * B, :] + jnp.dot(
            h, whh0, preferred_element_type=jnp.float32)
        i_g, f_g, g_g, o_g = gates(pre)
        c = f_g * c + i_g * g_g
        h = o_g * jnp.tanh(c)
        h0_steps.append(h)

    # ---- layer 1 ----
    # TODO(synk): nn.LSTM inter-layer dropout and nn.Dropout are identity in
    # eval/inference mode; training-mode stochastic dropout is not implemented.
    h0_all = jnp.concatenate(h0_steps, axis=0)                      # [T*B, H]
    g1_all = jnp.dot(h0_all, wih1, preferred_element_type=jnp.float32) + b1

    h = jnp.zeros((B, H), jnp.float32)
    c = jnp.zeros((B, H), jnp.float32)
    for t in range(T):
        pre = g1_all[t * B:(t + 1) * B, :] + jnp.dot(
            h, whh1, preferred_element_type=jnp.float32)
        i_g, f_g, g_g, o_g = gates(pre)
        c = f_g * c + i_g * g_g
        h = o_g * jnp.tanh(c)
    # h == top-layer output at the last timestep (out[:, -1, :]).

    # ---- FC head (fc1 split into h-part + cat-part: no lane concat) ----
    wfc1_h = fc_ref[0:H, :]                      # [H, 64]
    wfc1_c = fc_ref[H:H + C, :]                  # [C, 64]
    wfc2_r = fc_ref[H + C:H + C + 1, :]          # [1, 64]  (fc2 weight as a row)
    bfc1 = fc_ref[H + C + 1:H + C + 2, :]        # [1, 64]
    bfc2_row = fc_ref[H + C + 2:H + C + 3, :]    # [1, 64]  (bias replicated)
    bfc2 = bfc2_row[:, 0:1]                      # [1, 1]

    z1 = (jnp.dot(h, wfc1_h, preferred_element_type=jnp.float32)
          + jnp.dot(cat_ref[...], wfc1_c, preferred_element_type=jnp.float32)
          + bfc1)
    z1 = jnp.maximum(z1, 0.0)                                   # ReLU
    z2 = jnp.sum(z1 * wfc2_r, axis=1, keepdims=True) + bfc2     # [B, 1]
    p = jax.nn.sigmoid(z2)
    out_ref[...] = jnp.clip(p, 1e-7, 1.0 - 1e-7)


@jax.jit
def stock_lstm_forward(x_seq, x_cat, w_slab, fc_slab):
    B, T, I = x_seq.shape
    C = x_cat.shape[1]
    H = w_slab.shape[1] // 4
    kernel = functools.partial(stock_lstm_kernel, B=B, T=T, I=I, H=H, C=C)
    vmem = pl.BlockSpec(memory_space=pltpu.MemorySpace.VMEM)
    return pl.pallas_call(
        kernel,
        out_shape=jax.ShapeDtypeStruct((B, 1), jnp.float32),
        in_specs=[vmem, vmem, vmem, vmem],
        out_specs=vmem,
    )(x_seq.astype(jnp.float32), x_cat.astype(jnp.float32), w_slab, fc_slab)


def init_raw_params(key, input_size, hidden_size, categorical_size, fc_hidden=64):
    """PyTorch-like uniform(-1/sqrt(fan), 1/sqrt(fan)) init, PyTorch shapes."""
    H = hidden_size
    ks = jax.random.split(key, 12)
    k_lstm = 1.0 / float(H) ** 0.5
    comb = H + categorical_size
    k_fc1 = 1.0 / float(comb) ** 0.5
    k_fc2 = 1.0 / float(fc_hidden) ** 0.5

    def u(k, shape, scale):
        return jax.random.uniform(k, shape, jnp.float32, -scale, scale)

    return dict(
        w_ih0=u(ks[0], (4 * H, input_size), k_lstm),
        w_hh0=u(ks[1], (4 * H, H), k_lstm),
        b_ih0=u(ks[2], (4 * H,), k_lstm),
        b_hh0=u(ks[3], (4 * H,), k_lstm),
        w_ih1=u(ks[4], (4 * H, H), k_lstm),
        w_hh1=u(ks[5], (4 * H, H), k_lstm),
        b_ih1=u(ks[6], (4 * H,), k_lstm),
        b_hh1=u(ks[7], (4 * H,), k_lstm),
        w_fc1=u(ks[8], (fc_hidden, comb), k_fc1),
        b_fc1=u(ks[9], (fc_hidden,), k_fc1),
        w_fc2=u(ks[10], (1, fc_hidden), k_fc2),
        b_fc2=u(ks[11], (1,), k_fc2),
    )


def pack_params(raw, input_size, hidden_size, categorical_size):
    """Pack PyTorch-shaped params into 2 lane-friendly slabs.

    Weights are pre-transposed to [in, 4H]; the two LSTM biases are fused; the
    g-gate (candidate) columns of W_ih / W_hh / bias are scaled by 2 so the
    kernel can use the single-sigmoid gate trick (tanh(x) = 2*sigmoid(2x) - 1).
    """
    I, H, C = input_size, hidden_size, categorical_size

    def gscale(w):  # w: [*, 4H]
        return w.at[:, 2 * H:3 * H].multiply(2.0)

    wih0 = gscale(raw["w_ih0"].T.astype(jnp.float32))          # [I, 4H]
    whh0 = gscale(raw["w_hh0"].T.astype(jnp.float32))          # [H, 4H]
    wih1 = gscale(raw["w_ih1"].T.astype(jnp.float32))          # [H, 4H]
    whh1 = gscale(raw["w_hh1"].T.astype(jnp.float32))          # [H, 4H]
    b0 = gscale((raw["b_ih0"] + raw["b_hh0"])[None, :].astype(jnp.float32))
    b1 = gscale((raw["b_ih1"] + raw["b_hh1"])[None, :].astype(jnp.float32))

    pad = _round_up(I, 8) - I
    w_slab = jnp.concatenate(
        [wih0, jnp.zeros((pad, 4 * H), jnp.float32), whh0, wih1, whh1, b0, b1],
        axis=0)                                                # [202, 4H]

    wfc1 = raw["w_fc1"].T.astype(jnp.float32)                  # [H+C, 64]
    F = wfc1.shape[1]
    fc_slab = jnp.concatenate(
        [wfc1[:H, :],                                          # fc1, h part
         wfc1[H:, :],                                          # fc1, cat part
         raw["w_fc2"].astype(jnp.float32),                     # [1, 64] fc2 row
         raw["b_fc1"][None, :].astype(jnp.float32),            # [1, 64]
         jnp.full((1, F), raw["b_fc2"][0], jnp.float32)],      # [1, 64] bias2
        axis=0)                                                # [H+C+3, 64]
    return w_slab, fc_slab


def reference_forward(x_seq, x_cat, raw):
    """Pure-JAX reference matching torch nn.LSTM + FC head (eval mode)."""
    B, T, _ = x_seq.shape
    H = raw["w_hh0"].shape[1]

    def cell(x_t, h, c, w_ih, w_hh, b_ih, b_hh):
        g = x_t @ w_ih.T + h @ w_hh.T + b_ih + b_hh
        i = jax.nn.sigmoid(g[:, 0:H])
        f = jax.nn.sigmoid(g[:, H:2 * H])
        gg = jnp.tanh(g[:, 2 * H:3 * H])
        o = jax.nn.sigmoid(g[:, 3 * H:4 * H])
        c = f * c + i * gg
        h = o * jnp.tanh(c)
        return h, c

    h0 = c0 = h1 = c1 = jnp.zeros((B, H), jnp.float32)
    for t in range(T):
        h0, c0 = cell(x_seq[:, t, :], h0, c0,
                      raw["w_ih0"], raw["w_hh0"], raw["b_ih0"], raw["b_hh0"])
        h1, c1 = cell(h0, h1, c1,
                      raw["w_ih1"], raw["w_hh1"], raw["b_ih1"], raw["b_hh1"])
    combined = jnp.concatenate([h1, x_cat], axis=1)
    z1 = jnp.maximum(combined @ raw["w_fc1"].T + raw["b_fc1"], 0.0)
    z2 = z1 @ raw["w_fc2"].T + raw["b_fc2"]
    return jnp.clip(jax.nn.sigmoid(z2), 1e-7, 1.0 - 1e-7)


if __name__ == "__main__":
    # Shapes consistent with the module: input_size=5, hidden_size=64,
    # num_layers=2; small batch / seq / categorical picked for the demo.
    B, T, I = 8, 8, 5
    H, C = 64, 16

    key = jax.random.PRNGKey(0)
    k_x, k_cat, k_p = jax.random.split(key, 3)
    x_seq = jax.random.normal(k_x, (B, T, I), jnp.float32)
    x_cat = (jax.random.uniform(k_cat, (B, C)) > 0.5).astype(jnp.float32)

    raw = init_raw_params(k_p, I, H, C)
    w_slab, fc_slab = pack_params(raw, I, H, C)

    out = stock_lstm_forward(x_seq, x_cat, w_slab, fc_slab)
    out = jax.block_until_ready(out)

    ref = reference_forward(x_seq, x_cat, raw)
    assert out.shape == (B, 1)
    assert bool(jnp.all((out >= 1e-7) & (out <= 1.0 - 1e-7)))
    max_err = float(jnp.max(jnp.abs(out - ref)))
    assert max_err < 5e-3, f"kernel/reference mismatch: {max_err}"
    print("KERNEL_OK")
</pallas_src>

<mosaic_0001>
module attributes {stable_mosaic.version = 11 : i64} {
  func.func @stock_lstm_kernel(%arg0: memref<8x8x5xf32, #tpu.memory_space<vmem>>, %arg1: memref<8x16xf32, #tpu.memory_space<vmem>>, %arg2: memref<202x256xf32, #tpu.memory_space<vmem>>, %arg3: memref<83x64xf32, #tpu.memory_space<vmem>>, %arg4: memref<8x1xf32, #tpu.memory_space<vmem>>) attributes {dimension_semantics = [], scalar_prefetch = 0 : i64, scratch_operands = 0 : i64, tpu.core_type = #tpu.core_type<tc>} {
    %c0 = arith.constant 0 : index
    %c0_0 = arith.constant 0 : index
    %0 = vector.load %arg2[%c0, %c0_0] : memref<202x256xf32, #tpu.memory_space<vmem>>, vector<5x256xf32>
    %c8 = arith.constant 8 : index
    %c0_1 = arith.constant 0 : index
    %1 = vector.load %arg2[%c8, %c0_1] : memref<202x256xf32, #tpu.memory_space<vmem>>, vector<64x256xf32>
    %c72 = arith.constant 72 : index
    %c0_2 = arith.constant 0 : index
    %2 = vector.load %arg2[%c72, %c0_2] : memref<202x256xf32, #tpu.memory_space<vmem>>, vector<64x256xf32>
    %c136 = arith.constant 136 : index
    %c0_3 = arith.constant 0 : index
    %3 = vector.load %arg2[%c136, %c0_3] : memref<202x256xf32, #tpu.memory_space<vmem>>, vector<64x256xf32>
    %c200 = arith.constant 200 : index
    %c0_4 = arith.constant 0 : index
    %4 = vector.load %arg2[%c200, %c0_4] : memref<202x256xf32, #tpu.memory_space<vmem>>, vector<1x256xf32>
    %c201 = arith.constant 201 : index
    %c0_5 = arith.constant 0 : index
    %5 = vector.load %arg2[%c201, %c0_5] : memref<202x256xf32, #tpu.memory_space<vmem>>, vector<1x256xf32>
    %c0_6 = arith.constant 0 : index
    %c0_7 = arith.constant 0 : index
    %c0_8 = arith.constant 0 : index
    %6 = vector.load %arg0[%c0_6, %c0_7, %c0_8] : memref<8x8x5xf32, #tpu.memory_space<vmem>>, vector<8x8x5xf32>
    %7 = vector.extract_strided_slice %6 {offsets = [0, 0, 0], sizes = [8, 1, 5], strides = [1, 1, 1]} : vector<8x8x5xf32> to vector<8x1x5xf32>
    %8 = vector.shape_cast %7 : vector<8x1x5xf32> to vector<8x5xf32>
    %9 = vector.extract_strided_slice %6 {offsets = [0, 1, 0], sizes = [8, 1, 5], strides = [1, 1, 1]} : vector<8x8x5xf32> to vector<8x1x5xf32>
    %10 = vector.shape_cast %9 : vector<8x1x5xf32> to vector<8x5xf32>
    %11 = vector.extract_strided_slice %6 {offsets = [0, 2, 0], sizes = [8, 1, 5], strides = [1, 1, 1]} : vector<8x8x5xf32> to vector<8x1x5xf32>
    %12 = vector.shape_cast %11 : vector<8x1x5xf32> to vector<8x5xf32>
    %13 = vector.extract_strided_slice %6 {offsets = [0, 3, 0], sizes = [8, 1, 5], strides = [1, 1, 1]} : vector<8x8x5xf32> to vector<8x1x5xf32>
    %14 = vector.shape_cast %13 : vector<8x1x5xf32> to vector<8x5xf32>
    %15 = vector.extract_strided_slice %6 {offsets = [0, 4, 0], sizes = [8, 1, 5], strides = [1, 1, 1]} : vector<8x8x5xf32> to vector<8x1x5xf32>
    %16 = vector.shape_cast %15 : vector<8x1x5xf32> to vector<8x5xf32>
    %17 = vector.extract_strided_slice %6 {offsets = [0, 5, 0], sizes = [8, 1, 5], strides = [1, 1, 1]} : vector<8x8x5xf32> to vector<8x1x5xf32>
    %18 = vector.shape_cast %17 : vector<8x1x5xf32> to vector<8x5xf32>
    %19 = vector.extract_strided_slice %6 {offsets = [0, 6, 0], sizes = [8, 1, 5], strides = [1, 1, 1]} : vector<8x8x5xf32> to vector<8x1x5xf32>
    %20 = vector.shape_cast %19 : vector<8x1x5xf32> to vector<8x5xf32>
    %21 = vector.extract_strided_slice %6 {offsets = [0, 7, 0], sizes = [8, 1, 5], strides = [1, 1, 1]} : vector<8x8x5xf32> to vector<8x1x5xf32>
    %22 = vector.shape_cast %21 : vector<8x1x5xf32> to vector<8x5xf32>
    %23 = tpu.concatenate %8, %10, %12, %14, %16, %18, %20, %22 in 0 : vector<8x5xf32>, vector<8x5xf32>, vector<8x5xf32>, vector<8x5xf32>, vector<8x5xf32>, vector<8x5xf32>, vector<8x5xf32>, vector<8x5xf32> -> vector<64x5xf32>
    %cst = arith.constant dense<0.000000e+00> : vector<64x256xf32>
    %24 = tpu.matmul %23, %0, %cst {dimension_numbers = #tpu.dot_dimension_numbers<[1], [0], [0], [1], [0, 0, 1, 1], [], []>} : vector<64x5xf32>, vector<5x256xf32>, vector<64x256xf32> -> vector<64x256xf32>
    %25 = vector.broadcast %4 : vector<1x256xf32> to vector<64x256xf32>
    %26 = arith.addf %24, %25 : vector<64x256xf32>
    %cst_9 = arith.constant 0.000000e+00 : f32
    %27 = vector.broadcast %cst_9 : f32 to vector<8x64xf32>
    %cst_10 = arith.constant 0.000000e+00 : f32
    %28 = vector.broadcast %cst_10 : f32 to vector<8x64xf32>
    %29 = vector.extract_strided_slice %26 {offsets = [0, 0], sizes = [8, 256], strides = [1, 1]} : vector<64x256xf32> to vector<8x256xf32>
    %cst_11 = arith.constant dense<0.000000e+00> : vector<8x256xf32>
    %30 = tpu.matmul %27, %1, %cst_11 {dimension_numbers = #tpu.dot_dimension_numbers<[1], [0], [0], [1], [0, 0, 1, 1], [], []>} : vector<8x64xf32>, vector<64x256xf32>, vector<8x256xf32> -> vector<8x256xf32>
    %31 = arith.addf %29, %30 : vector<8x256xf32>
    %32 = arith.negf %31 : vector<8x256xf32>
    %33 = math.exp %32 : vector<8x256xf32>
    %cst_12 = arith.constant 1.000000e+00 : f32
    %34 = vector.broadcast %cst_12 : f32 to vector<8x256xf32>
    %35 = arith.addf %34, %33 : vector<8x256xf32>
    %36 = arith.divf %34, %35 : vector<8x256xf32>
    %37 = vector.extract_strided_slice %36 {offsets = [0, 0], sizes = [8, 64], strides = [1, 1]} : vector<8x256xf32> to vector<8x64xf32>
    %38 = vector.extract_strided_slice %36 {offsets = [0, 64], sizes = [8, 64], strides = [1, 1]} : vector<8x256xf32> to vector<8x64xf32>
    %39 = vector.extract_strided_slice %36 {offsets = [0, 128], sizes = [8, 64], strides = [1, 1]} : vector<8x256xf32> to vector<8x64xf32>
    %cst_13 = arith.constant 2.000000e+00 : f32
    %40 = vector.broadcast %cst_13 : f32 to vector<8x64xf32>
    %41 = arith.mulf %40, %39 : vector<8x64xf32>
    %cst_14 = arith.constant 1.000000e+00 : f32
    %42 = vector.broadcast %cst_14 : f32 to vector<8x64xf32>
    %43 = arith.subf %41, %42 : vector<8x64xf32>
    %44 = vector.extract_strided_slice %36 {offsets = [0, 192], sizes = [8, 64], strides = [1, 1]} : vector<8x256xf32> to vector<8x64xf32>
    %45 = arith.mulf %38, %28 : vector<8x64xf32>
    %46 = arith.mulf %37, %43 : vector<8x64xf32>
    %47 = arith.addf %45, %46 : vector<8x64xf32>
    %48 = math.tanh %47 : vector<8x64xf32>
    %49 = arith.mulf %44, %48 : vector<8x64xf32>
    %50 = vector.extract_strided_slice %26 {offsets = [8, 0], sizes = [8, 256], strides = [1, 1]} : vector<64x256xf32> to vector<8x256xf32>
    %cst_15 = arith.constant dense<0.000000e+00> : vector<8x256xf32>
    %51 = tpu.matmul %49, %1, %cst_15 {dimension_numbers = #tpu.dot_dimension_numbers<[1], [0], [0], [1], [0, 0, 1, 1], [], []>} : vector<8x64xf32>, vector<64x256xf32>, vector<8x256xf32> -> vector<8x256xf32>
    %52 = arith.addf %50, %51 : vector<8x256xf32>
    %53 = arith.negf %52 : vector<8x256xf32>
    %54 = math.exp %53 : vector<8x256xf32>
    %cst_16 = arith.constant 1.000000e+00 : f32
    %55 = vector.broadcast %cst_16 : f32 to vector<8x256xf32>
    %56 = arith.addf %55, %54 : vector<8x256xf32>
    %57 = arith.divf %55, %56 : vector<8x256xf32>
    %58 = vector.extract_strided_slice %57 {offsets = [0, 0], sizes = [8, 64], strides = [1, 1]} : vector<8x256xf32> to vector<8x64xf32>
    %59 = vector.extract_strided_slice %57 {offsets = [0, 64], sizes = [8, 64], strides = [1, 1]} : vector<8x256xf32> to vector<8x64xf32>
    %60 = vector.extract_strided_slice %57 {offsets = [0, 128], sizes = [8, 64], strides = [1, 1]} : vector<8x256xf32> to vector<8x64xf32>
    %cst_17 = arith.constant 2.000000e+00 : f32
    %61 = vector.broadcast %cst_17 : f32 to vector<8x64xf32>
    %62 = arith.mulf %61, %60 : vector<8x64xf32>
    %cst_18 = arith.constant 1.000000e+00 : f32
    %63 = vector.broadcast %cst_18 : f32 to vector<8x64xf32>
    %64 = arith.subf %62, %63 : vector<8x64xf32>
    %65 = vector.extract_strided_slice %57 {offsets = [0, 192], sizes = [8, 64], strides = [1, 1]} : vector<8x256xf32> to vector<8x64xf32>
    %66 = arith.mulf %59, %47 : vector<8x64xf32>
    %67 = arith.mulf %58, %64 : vector<8x64xf32>
    %68 = arith.addf %66, %67 : vector<8x64xf32>
    %69 = math.tanh %68 : vector<8x64xf32>
    %70 = arith.mulf %65, %69 : vector<8x64xf32>
    %71 = vector.extract_strided_slice %26 {offsets = [16, 0], sizes = [8, 256], strides = [1, 1]} : vector<64x256xf32> to vector<8x256xf32>
    %cst_19 = arith.constant dense<0.000000e+00> : vector<8x256xf32>
    %72 = tpu.matmul %70, %1, %cst_19 {dimension_numbers = #tpu.dot_dimension_numbers<[1], [0], [0], [1], [0, 0, 1, 1], [], []>} : vector<8x64xf32>, vector<64x256xf32>, vector<8x256xf32> -> vector<8x256xf32>
    %73 = arith.addf %71, %72 : vector<8x256xf32>
    %74 = arith.negf %73 : vector<8x256xf32>
    %75 = math.exp %74 : vector<8x256xf32>
    %cst_20 = arith.constant 1.000000e+00 : f32
    %76 = vector.broadcast %cst_20 : f32 to vector<8x256xf32>
    %77 = arith.addf %76, %75 : vector<8x256xf32>
    %78 = arith.divf %76, %77 : vector<8x256xf32>
    %79 = vector.extract_strided_slice %78 {offsets = [0, 0], sizes = [8, 64], strides = [1, 1]} : vector<8x256xf32> to vector<8x64xf32>
    %80 = vector.extract_strided_slice %78 {offsets = [0, 64], sizes = [8, 64], strides = [1, 1]} : vector<8x256xf32> to vector<8x64xf32>
    %81 = vector.extract_strided_slice %78 {offsets = [0, 128], sizes = [8, 64], strides = [1, 1]} : vector<8x256xf32> to vector<8x64xf32>
    %cst_21 = arith.constant 2.000000e+00 : f32
    %82 = vector.broadcast %cst_21 : f32 to vector<8x64xf32>
    %83 = arith.mulf %82, %81 : vector<8x64xf32>
    %cst_22 = arith.constant 1.000000e+00 : f32
    %84 = vector.broadcast %cst_22 : f32 to vector<8x64xf32>
    %85 = arith.subf %83, %84 : vector<8x64xf32>
    %86 = vector.extract_strided_slice %78 {offsets = [0, 192], sizes = [8, 64], strides = [1, 1]} : vector<8x256xf32> to vector<8x64xf32>
    %87 = arith.mulf %80, %68 : vector<8x64xf32>
    %88 = arith.mulf %79, %85 : vector<8x64xf32>
    %89 = arith.addf %87, %88 : vector<8x64xf32>
    %90 = math.tanh %89 : vector<8x64xf32>
    %91 = arith.mulf %86, %90 : vector<8x64xf32>
    %92 = vector.extract_strided_slice %26 {offsets = [24, 0], sizes = [8, 256], strides = [1, 1]} : vector<64x256xf32> to vector<8x256xf32>
    %cst_23 = arith.constant dense<0.000000e+00> : vector<8x256xf32>
    %93 = tpu.matmul %91, %1, %cst_23 {dimension_numbers = #tpu.dot_dimension_numbers<[1], [0], [0], [1], [0, 0, 1, 1], [], []>} : vector<8x64xf32>, vector<64x256xf32>, vector<8x256xf32> -> vector<8x256xf32>
    %94 = arith.addf %92, %93 : vector<8x256xf32>
    %95 = arith.negf %94 : vector<8x256xf32>
    %96 = math.exp %95 : vector<8x256xf32>
    %cst_24 = arith.constant 1.000000e+00 : f32
    %97 = vector.broadcast %cst_24 : f32 to vector<8x256xf32>
    %98 = arith.addf %97, %96 : vector<8x256xf32>
    %99 = arith.divf %97, %98 : vector<8x256xf32>
    %100 = vector.extract_strided_slice %99 {offsets = [0, 0], sizes = [8, 64], strides = [1, 1]} : vector<8x256xf32> to vector<8x64xf32>
    %101 = vector.extract_strided_slice %99 {offsets = [0, 64], sizes = [8, 64], strides = [1, 1]} : vector<8x256xf32> to vector<8x64xf32>
    %102 = vector.extract_strided_slice %99 {offsets = [0, 128], sizes = [8, 64], strides = [1, 1]} : vector<8x256xf32> to vector<8x64xf32>
    %cst_25 = arith.constant 2.000000e+00 : f32
    %103 = vector.broadcast %cst_25 : f32 to vector<8x64xf32>
    %104 = arith.mulf %103, %102 : vector<8x64xf32>
    %cst_26 = arith.constant 1.000000e+00 : f32
    %105 = vector.broadcast %cst_26 : f32 to vector<8x64xf32>
    %106 = arith.subf %104, %105 : vector<8x64xf32>
    %107 = vector.extract_strided_slice %99 {offsets = [0, 192], sizes = [8, 64], strides = [1, 1]} : vector<8x256xf32> to vector<8x64xf32>
    %108 = arith.mulf %101, %89 : vector<8x64xf32>
    %109 = arith.mulf %100, %106 : vector<8x64xf32>
    %110 = arith.addf %108, %109 : vector<8x64xf32>
    %111 = math.tanh %110 : vector<8x64xf32>
    %112 = arith.mulf %107, %111 : vector<8x64xf32>
    %113 = vector.extract_strided_slice %26 {offsets = [32, 0], sizes = [8, 256], strides = [1, 1]} : vector<64x256xf32> to vector<8x256xf32>
    %cst_27 = arith.constant dense<0.000000e+00> : vector<8x256xf32>
    %114 = tpu.matmul %112, %1, %cst_27 {dimension_numbers = #tpu.dot_dimension_numbers<[1], [0], [0], [1], [0, 0, 1, 1], [], []>} : vector<8x64xf32>, vector<64x256xf32>, vector<8x256xf32> -> vector<8x256xf32>
    %115 = arith.addf %113, %114 : vector<8x256xf32>
    %116 = arith.negf %115 : vector<8x256xf32>
    %117 = math.exp %116 : vector<8x256xf32>
    %cst_28 = arith.constant 1.000000e+00 : f32
    %118 = vector.broadcast %cst_28 : f32 to vector<8x256xf32>
    %119 = arith.addf %118, %117 : vector<8x256xf32>
    %120 = arith.divf %118, %119 : vector<8x256xf32>
    %121 = vector.extract_strided_slice %120 {offsets = [0, 0], sizes = [8, 64], strides = [1, 1]} : vector<8x256xf32> to vector<8x64xf32>
    %122 = vector.extract_strided_slice %120 {offsets = [0, 64], sizes = [8, 64], strides = [1, 1]} : vector<8x256xf32> to vector<8x64xf32>
    %123 = vector.extract_strided_slice %120 {offsets = [0, 128], sizes = [8, 64], strides = [1, 1]} : vector<8x256xf32> to vector<8x64xf32>
    %cst_29 = arith.constant 2.000000e+00 : f32
    %124 = vector.broadcast %cst_29 : f32 to vector<8x64xf32>
    %125 = arith.mulf %124, %123 : vector<8x64xf32>
    %cst_30 = arith.constant 1.000000e+00 : f32
    %126 = vector.broadcast %cst_30 : f32 to vector<8x64xf32>
    %127 = arith.subf %125, %126 : vector<8x64xf32>
    %128 = vector.extract_strided_slice %120 {offsets = [0, 192], sizes = [8, 64], strides = [1, 1]} : vector<8x256xf32> to vector<8x64xf32>
    %129 = arith.mulf %122, %110 : vector<8x64xf32>
    %130 = arith.mulf %121, %127 : vector<8x64xf32>
    %131 = arith.addf %129, %130 : vector<8x64xf32>
    %132 = math.tanh %131 : vector<8x64xf32>
    %133 = arith.mulf %128, %132 : vector<8x64xf32>
    %134 = vector.extract_strided_slice %26 {offsets = [40, 0], sizes = [8, 256], strides = [1, 1]} : vector<64x256xf32> to vector<8x256xf32>
    %cst_31 = arith.constant dense<0.000000e+00> : vector<8x256xf32>
    %135 = tpu.matmul %133, %1, %cst_31 {dimension_numbers = #tpu.dot_dimension_numbers<[1], [0], [0], [1], [0, 0, 1, 1], [], []>} : vector<8x64xf32>, vector<64x256xf32>, vector<8x256xf32> -> vector<8x256xf32>
    %136 = arith.addf %134, %135 : vector<8x256xf32>
    %137 = arith.negf %136 : vector<8x256xf32>
    %138 = math.exp %137 : vector<8x256xf32>
    %cst_32 = arith.constant 1.000000e+00 : f32
    %139 = vector.broadcast %cst_32 : f32 to vector<8x256xf32>
    %140 = arith.addf %139, %138 : vector<8x256xf32>
    %141 = arith.divf %139, %140 : vector<8x256xf32>
    %142 = vector.extract_strided_slice %141 {offsets = [0, 0], sizes = [8, 64], strides = [1, 1]} : vector<8x256xf32> to vector<8x64xf32>
    %143 = vector.extract_strided_slice %141 {offsets = [0, 64], sizes = [8, 64], strides = [1, 1]} : vector<8x256xf32> to vector<8x64xf32>
    %144 = vector.extract_strided_slice %141 {offsets = [0, 128], sizes = [8, 64], strides = [1, 1]} : vector<8x256xf32> to vector<8x64xf32>
    %cst_33 = arith.constant 2.000000e+00 : f32
    %145 = vector.broadcast %cst_33 : f32 to vector<8x64xf32>
    %146 = arith.mulf %145, %144 : vector<8x64xf32>
    %cst_34 = arith.constant 1.000000e+00 : f32
    %147 = vector.broadcast %cst_34 : f32 to vector<8x64xf32>
    %148 = arith.subf %146, %147 : vector<8x64xf32>
    %149 = vector.extract_strided_slice %141 {offsets = [0, 192], sizes = [8, 64], strides = [1, 1]} : vector<8x256xf32> to vector<8x64xf32>
    %150 = arith.mulf %143, %131 : vector<8x64xf32>
    %151 = arith.mulf %142, %148 : vector<8x64xf32>
    %152 = arith.addf %150, %151 : vector<8x64xf32>
    %153 = math.tanh %152 : vector<8x64xf32>
    %154 = arith.mulf %149, %153 : vector<8x64xf32>
    %155 = vector.extract_strided_slice %26 {offsets = [48, 0], sizes = [8, 256], strides = [1, 1]} : vector<64x256xf32> to vector<8x256xf32>
    %cst_35 = arith.constant dense<0.000000e+00> : vector<8x256xf32>
    %156 = tpu.matmul %154, %1, %cst_35 {dimension_numbers = #tpu.dot_dimension_numbers<[1], [0], [0], [1], [0, 0, 1, 1], [], []>} : vector<8x64xf32>, vector<64x256xf32>, vector<8x256xf32> -> vector<8x256xf32>
    %157 = arith.addf %155, %156 : vector<8x256xf32>
    %158 = arith.negf %157 : vector<8x256xf32>
    %159 = math.exp %158 : vector<8x256xf32>
    %cst_36 = arith.constant 1.000000e+00 : f32
    %160 = vector.broadcast %cst_36 : f32 to vector<8x256xf32>
    %161 = arith.addf %160, %159 : vector<8x256xf32>
    %162 = arith.divf %160, %161 : vector<8x256xf32>
    %163 = vector.extract_strided_slice %162 {offsets = [0, 0], sizes = [8, 64], strides = [1, 1]} : vector<8x256xf32> to vector<8x64xf32>
    %164 = vector.extract_strided_slice %162 {offsets = [0, 64], sizes = [8, 64], strides = [1, 1]} : vector<8x256xf32> to vector<8x64xf32>
    %165 = vector.extract_strided_slice %162 {offsets = [0, 128], sizes = [8, 64], strides = [1, 1]} : vector<8x256xf32> to vector<8x64xf32>
    %cst_37 = arith.constant 2.000000e+00 : f32
    %166 = vector.broadcast %cst_37 : f32 to vector<8x64xf32>
    %167 = arith.mulf %166, %165 : vector<8x64xf32>
    %cst_38 = arith.constant 1.000000e+00 : f32
    %168 = vector.broadcast %cst_38 : f32 to vector<8x64xf32>
    %169 = arith.subf %167, %168 : vector<8x64xf32>
    %170 = vector.extract_strided_slice %162 {offsets = [0, 192], sizes = [8, 64], strides = [1, 1]} : vector<8x256xf32> to vector<8x64xf32>
    %171 = arith.mulf %164, %152 : vector<8x64xf32>
    %172 = arith.mulf %163, %169 : vector<8x64xf32>
    %173 = arith.addf %171, %172 : vector<8x64xf32>
    %174 = math.tanh %173 : vector<8x64xf32>
    %175 = arith.mulf %170, %174 : vector<8x64xf32>
    %176 = vector.extract_strided_slice %26 {offsets = [56, 0], sizes = [8, 256], strides = [1, 1]} : vector<64x256xf32> to vector<8x256xf32>
    %cst_39 = arith.constant dense<0.000000e+00> : vector<8x256xf32>
    %177 = tpu.matmul %175, %1, %cst_39 {dimension_numbers = #tpu.dot_dimension_numbers<[1], [0], [0], [1], [0, 0, 1, 1], [], []>} : vector<8x64xf32>, vector<64x256xf32>, vector<8x256xf32> -> vector<8x256xf32>
    %178 = arith.addf %176, %177 : vector<8x256xf32>
    %179 = arith.negf %178 : vector<8x256xf32>
    %180 = math.exp %179 : vector<8x256xf32>
    %cst_40 = arith.constant 1.000000e+00 : f32
    %181 = vector.broadcast %cst_40 : f32 to vector<8x256xf32>
    %182 = arith.addf %181, %180 : vector<8x256xf32>
    %183 = arith.divf %181, %182 : vector<8x256xf32>
    %184 = vector.extract_strided_slice %183 {offsets = [0, 0], sizes = [8, 64], strides = [1, 1]} : vector<8x256xf32> to vector<8x64xf32>
    %185 = vector.extract_strided_slice %183 {offsets = [0, 64], sizes = [8, 64], strides = [1, 1]} : vector<8x256xf32> to vector<8x64xf32>
    %186 = vector.extract_strided_slice %183 {offsets = [0, 128], sizes = [8, 64], strides = [1, 1]} : vector<8x256xf32> to vector<8x64xf32>
    %cst_41 = arith.constant 2.000000e+00 : f32
    %187 = vector.broadcast %cst_41 : f32 to vector<8x64xf32>
    %188 = arith.mulf %187, %186 : vector<8x64xf32>
    %cst_42 = arith.constant 1.000000e+00 : f32
    %189 = vector.broadcast %cst_42 : f32 to vector<8x64xf32>
    %190 = arith.subf %188, %189 : vector<8x64xf32>
    %191 = vector.extract_strided_slice %183 {offsets = [0, 192], sizes = [8, 64], strides = [1, 1]} : vector<8x256xf32> to vector<8x64xf32>
    %192 = arith.mulf %185, %173 : vector<8x64xf32>
    %193 = arith.mulf %184, %190 : vector<8x64xf32>
    %194 = arith.addf %192, %193 : vector<8x64xf32>
    %195 = math.tanh %194 : vector<8x64xf32>
    %196 = arith.mulf %191, %195 : vector<8x64xf32>
    %197 = tpu.concatenate %49, %70, %91, %112, %133, %154, %175, %196 in 0 : vector<8x64xf32>, vector<8x64xf32>, vector<8x64xf32>, vector<8x64xf32>, vector<8x64xf32>, vector<8x64xf32>, vector<8x64xf32>, vector<8x64xf32> -> vector<64x64xf32>
    %cst_43 = arith.constant dense<0.000000e+00> : vector<64x256xf32>
    %198 = tpu.matmul %197, %2, %cst_43 {dimension_numbers = #tpu.dot_dimension_numbers<[1], [0], [0], [1], [0, 0, 1, 1], [], []>} : vector<64x64xf32>, vector<64x256xf32>, vector<64x256xf32> -> vector<64x256xf32>
    %199 = vector.broadcast %5 : vector<1x256xf32> to vector<64x256xf32>
    %200 = arith.addf %198, %199 : vector<64x256xf32>
    %cst_44 = arith.constant 0.000000e+00 : f32
    %201 = vector.broadcast %cst_44 : f32 to vector<8x64xf32>
    %cst_45 = arith.constant 0.000000e+00 : f32
    %202 = vector.broadcast %cst_45 : f32 to vector<8x64xf32>
    %203 = vector.extract_strided_slice %200 {offsets = [0, 0], sizes = [8, 256], strides = [1, 1]} : vector<64x256xf32> to vector<8x256xf32>
    %cst_46 = arith.constant dense<0.000000e+00> : vector<8x256xf32>
    %204 = tpu.matmul %201, %3, %cst_46 {dimension_numbers = #tpu.dot_dimension_numbers<[1], [0], [0], [1], [0, 0, 1, 1], [], []>} : vector<8x64xf32>, vector<64x256xf32>, vector<8x256xf32> -> vector<8x256xf32>
    %205 = arith.addf %203, %204 : vector<8x256xf32>
    %206 = arith.negf %205 : vector<8x256xf32>
    %207 = math.exp %206 : vector<8x256xf32>
    %cst_47 = arith.constant 1.000000e+00 : f32
    %208 = vector.broadcast %cst_47 : f32 to vector<8x256xf32>
    %209 = arith.addf %208, %207 : vector<8x256xf32>
    %210 = arith.divf %208, %209 : vector<8x256xf32>
    %211 = vector.extract_strided_slice %210 {offsets = [0, 0], sizes = [8, 64], strides = [1, 1]} : vector<8x256xf32> to vector<8x64xf32>
    %212 = vector.extract_strided_slice %210 {offsets = [0, 64], sizes = [8, 64], strides = [1, 1]} : vector<8x256xf32> to vector<8x64xf32>
    %213 = vector.extract_strided_slice %210 {offsets = [0, 128], sizes = [8, 64], strides = [1, 1]} : vector<8x256xf32> to vector<8x64xf32>
    %cst_48 = arith.constant 2.000000e+00 : f32
    %214 = vector.broadcast %cst_48 : f32 to vector<8x64xf32>
    %215 = arith.mulf %214, %213 : vector<8x64xf32>
    %cst_49 = arith.constant 1.000000e+00 : f32
    %216 = vector.broadcast %cst_49 : f32 to vector<8x64xf32>
    %217 = arith.subf %215, %216 : vector<8x64xf32>
    %218 = vector.extract_strided_slice %210 {offsets = [0, 192], sizes = [8, 64], strides = [1, 1]} : vector<8x256xf32> to vector<8x64xf32>
    %219 = arith.mulf %212, %202 : vector<8x64xf32>
    %220 = arith.mulf %211, %217 : vector<8x64xf32>
    %221 = arith.addf %219, %220 : vector<8x64xf32>
    %222 = math.tanh %221 : vector<8x64xf32>
    %223 = arith.mulf %218, %222 : vector<8x64xf32>
    %224 = vector.extract_strided_slice %200 {offsets = [8, 0], sizes = [8, 256], strides = [1, 1]} : vector<64x256xf32> to vector<8x256xf32>
    %cst_50 = arith.constant dense<0.000000e+00> : vector<8x256xf32>
    %225 = tpu.matmul %223, %3, %cst_50 {dimension_numbers = #tpu.dot_dimension_numbers<[1], [0], [0], [1], [0, 0, 1, 1], [], []>} : vector<8x64xf32>, vector<64x256xf32>, vector<8x256xf32> -> vector<8x256xf32>
    %226 = arith.addf %224, %225 : vector<8x256xf32>
    %227 = arith.negf %226 : vector<8x256xf32>
    %228 = math.exp %227 : vector<8x256xf32>
    %cst_51 = arith.constant 1.000000e+00 : f32
    %229 = vector.broadcast %cst_51 : f32 to vector<8x256xf32>
    %230 = arith.addf %229, %228 : vector<8x256xf32>
    %231 = arith.divf %229, %230 : vector<8x256xf32>
    %232 = vector.extract_strided_slice %231 {offsets = [0, 0], sizes = [8, 64], strides = [1, 1]} : vector<8x256xf32> to vector<8x64xf32>
    %233 = vector.extract_strided_slice %231 {offsets = [0, 64], sizes = [8, 64], strides = [1, 1]} : vector<8x256xf32> to vector<8x64xf32>
    %234 = vector.extract_strided_slice %231 {offsets = [0, 128], sizes = [8, 64], strides = [1, 1]} : vector<8x256xf32> to vector<8x64xf32>
    %cst_52 = arith.constant 2.000000e+00 : f32
    %235 = vector.broadcast %cst_52 : f32 to vector<8x64xf32>
    %236 = arith.mulf %235, %234 : vector<8x64xf32>
    %cst_53 = arith.constant 1.000000e+00 : f32
    %237 = vector.broadcast %cst_53 : f32 to vector<8x64xf32>
    %238 = arith.subf %236, %237 : vector<8x64xf32>
    %239 = vector.extract_strided_slice %231 {offsets = [0, 192], sizes = [8, 64], strides = [1, 1]} : vector<8x256xf32> to vector<8x64xf32>
    %240 = arith.mulf %233, %221 : vector<8x64xf32>
    %241 = arith.mulf %232, %238 : vector<8x64xf32>
    %242 = arith.addf %240, %241 : vector<8x64xf32>
    %243 = math.tanh %242 : vector<8x64xf32>
    %244 = arith.mulf %239, %243 : vector<8x64xf32>
    %245 = vector.extract_strided_slice %200 {offsets = [16, 0], sizes = [8, 256], strides = [1, 1]} : vector<64x256xf32> to vector<8x256xf32>
    %cst_54 = arith.constant dense<0.000000e+00> : vector<8x256xf32>
    %246 = tpu.matmul %244, %3, %cst_54 {dimension_numbers = #tpu.dot_dimension_numbers<[1], [0], [0], [1], [0, 0, 1, 1], [], []>} : vector<8x64xf32>, vector<64x256xf32>, vector<8x256xf32> -> vector<8x256xf32>
    %247 = arith.addf %245, %246 : vector<8x256xf32>
    %248 = arith.negf %247 : vector<8x256xf32>
    %249 = math.exp %248 : vector<8x256xf32>
    %cst_55 = arith.constant 1.000000e+00 : f32
    %250 = vector.broadcast %cst_55 : f32 to vector<8x256xf32>
    %251 = arith.addf %250, %249 : vector<8x256xf32>
    %252 = arith.divf %250, %251 : vector<8x256xf32>
    %253 = vector.extract_strided_slice %252 {offsets = [0, 0], sizes = [8, 64], strides = [1, 1]} : vector<8x256xf32> to vector<8x64xf32>
    %254 = vector.extract_strided_slice %252 {offsets = [0, 64], sizes = [8, 64], strides = [1, 1]} : vector<8x256xf32> to vector<8x64xf32>
    %255 = vector.extract_strided_slice %252 {offsets = [0, 128], sizes = [8, 64], strides = [1, 1]} : vector<8x256xf32> to vector<8x64xf32>
    %cst_56 = arith.constant 2.000000e+00 : f32
    %256 = vector.broadcast %cst_56 : f32 to vector<8x64xf32>
    %257 = arith.mulf %256, %255 : vector<8x64xf32>
    %cst_57 = arith.constant 1.000000e+00 : f32
    %258 = vector.broadcast %cst_57 : f32 to vector<8x64xf32>
    %259 = arith.subf %257, %258 : vector<8x64xf32>
    %260 = vector.extract_strided_slice %252 {offsets = [0, 192], sizes = [8, 64], strides = [1, 1]} : vector<8x256xf32> to vector<8x64xf32>
    %261 = arith.mulf %254, %242 : vector<8x64xf32>
    %262 = arith.mulf %253, %259 : vector<8x64xf32>
    %263 = arith.addf %261, %262 : vector<8x64xf32>
    %264 = math.tanh %263 : vector<8x64xf32>
    %265 = arith.mulf %260, %264 : vector<8x64xf32>
    %266 = vector.extract_strided_slice %200 {offsets = [24, 0], sizes = [8, 256], strides = [1, 1]} : vector<64x256xf32> to vector<8x256xf32>
    %cst_58 = arith.constant dense<0.000000e+00> : vector<8x256xf32>
    %267 = tpu.matmul %265, %3, %cst_58 {dimension_numbers = #tpu.dot_dimension_numbers<[1], [0], [0], [1], [0, 0, 1, 1], [], []>} : vector<8x64xf32>, vector<64x256xf32>, vector<8x256xf32> -> vector<8x256xf32>
    %268 = arith.addf %266, %267 : vector<8x256xf32>
    %269 = arith.negf %268 : vector<8x256xf32>
    %270 = math.exp %269 : vector<8x256xf32>
    %cst_59 = arith.constant 1.000000e+00 : f32
    %271 = vector.broadcast %cst_59 : f32 to vector<8x256xf32>
    %272 = arith.addf %271, %270 : vector<8x256xf32>
    %273 = arith.divf %271, %272 : vector<8x256xf32>
    %274 = vector.extract_strided_slice %273 {offsets = [0, 0], sizes = [8, 64], strides = [1, 1]} : vector<8x256xf32> to vector<8x64xf32>
    %275 = vector.extract_strided_slice %273 {offsets = [0, 64], sizes = [8, 64], strides = [1, 1]} : vector<8x256xf32> to vector<8x64xf32>
    %276 = vector.extract_strided_slice %273 {offsets = [0, 128], sizes = [8, 64], strides = [1, 1]} : vector<8x256xf32> to vector<8x64xf32>
    %cst_60 = arith.constant 2.000000e+00 : f32
    %277 = vector.broadcast %cst_60 : f32 to vector<8x64xf32>
    %278 = arith.mulf %277, %276 : vector<8x64xf32>
    %cst_61 = arith.constant 1.000000e+00 : f32
    %279 = vector.broadcast %cst_61 : f32 to vector<8x64xf32>
    %280 = arith.subf %278, %279 : vector<8x64xf32>
    %281 = vector.extract_strided_slice %273 {offsets = [0, 192], sizes = [8, 64], strides = [1, 1]} : vector<8x256xf32> to vector<8x64xf32>
    %282 = arith.mulf %275, %263 : vector<8x64xf32>
    %283 = arith.mulf %274, %280 : vector<8x64xf32>
    %284 = arith.addf %282, %283 : vector<8x64xf32>
    %285 = math.tanh %284 : vector<8x64xf32>
    %286 = arith.mulf %281, %285 : vector<8x64xf32>
    %287 = vector.extract_strided_slice %200 {offsets = [32, 0], sizes = [8, 256], strides = [1, 1]} : vector<64x256xf32> to vector<8x256xf32>
    %cst_62 = arith.constant dense<0.000000e+00> : vector<8x256xf32>
    %288 = tpu.matmul %286, %3, %cst_62 {dimension_numbers = #tpu.dot_dimension_numbers<[1], [0], [0], [1], [0, 0, 1, 1], [], []>} : vector<8x64xf32>, vector<64x256xf32>, vector<8x256xf32> -> vector<8x256xf32>
    %289 = arith.addf %287, %288 : vector<8x256xf32>
    %290 = arith.negf %289 : vector<8x256xf32>
    %291 = math.exp %290 : vector<8x256xf32>
    %cst_63 = arith.constant 1.000000e+00 : f32
    %292 = vector.broadcast %cst_63 : f32 to vector<8x256xf32>
    %293 = arith.addf %292, %291 : vector<8x256xf32>
    %294 = arith.divf %292, %293 : vector<8x256xf32>
    %295 = vector.extract_strided_slice %294 {offsets = [0, 0], sizes = [8, 64], strides = [1, 1]} : vector<8x256xf32> to vector<8x64xf32>
    %296 = vector.extract_strided_slice %294 {offsets = [0, 64], sizes = [8, 64], strides = [1, 1]} : vector<8x256xf32> to vector<8x64xf32>
    %297 = vector.extract_strided_slice %294 {offsets = [0, 128], sizes = [8, 64], strides = [1, 1]} : vector<8x256xf32> to vector<8x64xf32>
    %cst_64 = arith.constant 2.000000e+00 : f32
    %298 = vector.broadcast %cst_64 : f32 to vector<8x64xf32>
    %299 = arith.mulf %298, %297 : vector<8x64xf32>
    %cst_65 = arith.constant 1.000000e+00 : f32
    %300 = vector.broadcast %cst_65 : f32 to vector<8x64xf32>
    %301 = arith.subf %299, %300 : vector<8x64xf32>
    %302 = vector.extract_strided_slice %294 {offsets = [0, 192], sizes = [8, 64], strides = [1, 1]} : vector<8x256xf32> to vector<8x64xf32>
    %303 = arith.mulf %296, %284 : vector<8x64xf32>
    %304 = arith.mulf %295, %301 : vector<8x64xf32>
    %305 = arith.addf %303, %304 : vector<8x64xf32>
    %306 = math.tanh %305 : vector<8x64xf32>
    %307 = arith.mulf %302, %306 : vector<8x64xf32>
    %308 = vector.extract_strided_slice %200 {offsets = [40, 0], sizes = [8, 256], strides = [1, 1]} : vector<64x256xf32> to vector<8x256xf32>
    %cst_66 = arith.constant dense<0.000000e+00> : vector<8x256xf32>
    %309 = tpu.matmul %307, %3, %cst_66 {dimension_numbers = #tpu.dot_dimension_numbers<[1], [0], [0], [1], [0, 0, 1, 1], [], []>} : vector<8x64xf32>, vector<64x256xf32>, vector<8x256xf32> -> vector<8x256xf32>
    %310 = arith.addf %308, %309 : vector<8x256xf32>
    %311 = arith.negf %310 : vector<8x256xf32>
    %312 = math.exp %311 : vector<8x256xf32>
    %cst_67 = arith.constant 1.000000e+00 : f32
    %313 = vector.broadcast %cst_67 : f32 to vector<8x256xf32>
    %314 = arith.addf %313, %312 : vector<8x256xf32>
    %315 = arith.divf %313, %314 : vector<8x256xf32>
    %316 = vector.extract_strided_slice %315 {offsets = [0, 0], sizes = [8, 64], strides = [1, 1]} : vector<8x256xf32> to vector<8x64xf32>
    %317 = vector.extract_strided_slice %315 {offsets = [0, 64], sizes = [8, 64], strides = [1, 1]} : vector<8x256xf32> to vector<8x64xf32>
    %318 = vector.extract_strided_slice %315 {offsets = [0, 128], sizes = [8, 64], strides = [1, 1]} : vector<8x256xf32> to vector<8x64xf32>
    %cst_68 = arith.constant 2.000000e+00 : f32
    %319 = vector.broadcast %cst_68 : f32 to vector<8x64xf32>
    %320 = arith.mulf %319, %318 : vector<8x64xf32>
    %cst_69 = arith.constant 1.000000e+00 : f32
    %321 = vector.broadcast %cst_69 : f32 to vector<8x64xf32>
    %322 = arith.subf %320, %321 : vector<8x64xf32>
    %323 = vector.extract_strided_slice %315 {offsets = [0, 192], sizes = [8, 64], strides = [1, 1]} : vector<8x256xf32> to vector<8x64xf32>
    %324 = arith.mulf %317, %305 : vector<8x64xf32>
    %325 = arith.mulf %316, %322 : vector<8x64xf32>
    %326 = arith.addf %324, %325 : vector<8x64xf32>
    %327 = math.tanh %326 : vector<8x64xf32>
    %328 = arith.mulf %323, %327 : vector<8x64xf32>
    %329 = vector.extract_strided_slice %200 {offsets = [48, 0], sizes = [8, 256], strides = [1, 1]} : vector<64x256xf32> to vector<8x256xf32>
    %cst_70 = arith.constant dense<0.000000e+00> : vector<8x256xf32>
    %330 = tpu.matmul %328, %3, %cst_70 {dimension_numbers = #tpu.dot_dimension_numbers<[1], [0], [0], [1], [0, 0, 1, 1], [], []>} : vector<8x64xf32>, vector<64x256xf32>, vector<8x256xf32> -> vector<8x256xf32>
    %331 = arith.addf %329, %330 : vector<8x256xf32>
    %332 = arith.negf %331 : vector<8x256xf32>
    %333 = math.exp %332 : vector<8x256xf32>
    %cst_71 = arith.constant 1.000000e+00 : f32
    %334 = vector.broadcast %cst_71 : f32 to vector<8x256xf32>
    %335 = arith.addf %334, %333 : vector<8x256xf32>
    %336 = arith.divf %334, %335 : vector<8x256xf32>
    %337 = vector.extract_strided_slice %336 {offsets = [0, 0], sizes = [8, 64], strides = [1, 1]} : vector<8x256xf32> to vector<8x64xf32>
    %338 = vector.extract_strided_slice %336 {offsets = [0, 64], sizes = [8, 64], strides = [1, 1]} : vector<8x256xf32> to vector<8x64xf32>
    %339 = vector.extract_strided_slice %336 {offsets = [0, 128], sizes = [8, 64], strides = [1, 1]} : vector<8x256xf32> to vector<8x64xf32>
    %cst_72 = arith.constant 2.000000e+00 : f32
    %340 = vector.broadcast %cst_72 : f32 to vector<8x64xf32>
    %341 = arith.mulf %340, %339 : vector<8x64xf32>
    %cst_73 = arith.constant 1.000000e+00 : f32
    %342 = vector.broadcast %cst_73 : f32 to vector<8x64xf32>
    %343 = arith.subf %341, %342 : vector<8x64xf32>
    %344 = vector.extract_strided_slice %336 {offsets = [0, 192], sizes = [8, 64], strides = [1, 1]} : vector<8x256xf32> to vector<8x64xf32>
    %345 = arith.mulf %338, %326 : vector<8x64xf32>
    %346 = arith.mulf %337, %343 : vector<8x64xf32>
    %347 = arith.addf %345, %346 : vector<8x64xf32>
    %348 = math.tanh %347 : vector<8x64xf32>
    %349 = arith.mulf %344, %348 : vector<8x64xf32>
    %350 = vector.extract_strided_slice %200 {offsets = [56, 0], sizes = [8, 256], strides = [1, 1]} : vector<64x256xf32> to vector<8x256xf32>
    %cst_74 = arith.constant dense<0.000000e+00> : vector<8x256xf32>
    %351 = tpu.matmul %349, %3, %cst_74 {dimension_numbers = #tpu.dot_dimension_numbers<[1], [0], [0], [1], [0, 0, 1, 1], [], []>} : vector<8x64xf32>, vector<64x256xf32>, vector<8x256xf32> -> vector<8x256xf32>
    %352 = arith.addf %350, %351 : vector<8x256xf32>
    %353 = arith.negf %352 : vector<8x256xf32>
    %354 = math.exp %353 : vector<8x256xf32>
    %cst_75 = arith.constant 1.000000e+00 : f32
    %355 = vector.broadcast %cst_75 : f32 to vector<8x256xf32>
    %356 = arith.addf %355, %354 : vector<8x256xf32>
    %357 = arith.divf %355, %356 : vector<8x256xf32>
    %358 = vector.extract_strided_slice %357 {offsets = [0, 0], sizes = [8, 64], strides = [1, 1]} : vector<8x256xf32> to vector<8x64xf32>
    %359 = vector.extract_strided_slice %357 {offsets = [0, 64], sizes = [8, 64], strides = [1, 1]} : vector<8x256xf32> to vector<8x64xf32>
    %360 = vector.extract_strided_slice %357 {offsets = [0, 128], sizes = [8, 64], strides = [1, 1]} : vector<8x256xf32> to vector<8x64xf32>
    %cst_76 = arith.constant 2.000000e+00 : f32
    %361 = vector.broadcast %cst_76 : f32 to vector<8x64xf32>
    %362 = arith.mulf %361, %360 : vector<8x64xf32>
    %cst_77 = arith.constant 1.000000e+00 : f32
    %363 = vector.broadcast %cst_77 : f32 to vector<8x64xf32>
    %364 = arith.subf %362, %363 : vector<8x64xf32>
    %365 = vector.extract_strided_slice %357 {offsets = [0, 192], sizes = [8, 64], strides = [1, 1]} : vector<8x256xf32> to vector<8x64xf32>
    %366 = arith.mulf %359, %347 : vector<8x64xf32>
    %367 = arith.mulf %358, %364 : vector<8x64xf32>
    %368 = arith.addf %366, %367 : vector<8x64xf32>
    %369 = math.tanh %368 : vector<8x64xf32>
    %370 = arith.mulf %365, %369 : vector<8x64xf32>
    %c0_78 = arith.constant 0 : index
    %c0_79 = arith.constant 0 : index
    %371 = vector.load %arg3[%c0_78, %c0_79] : memref<83x64xf32, #tpu.memory_space<vmem>>, vector<64x64xf32>
    %c64 = arith.constant 64 : index
    %c0_80 = arith.constant 0 : index
    %372 = vector.load %arg3[%c64, %c0_80] : memref<83x64xf32, #tpu.memory_space<vmem>>, vector<16x64xf32>
    %c80 = arith.constant 80 : index
    %c0_81 = arith.constant 0 : index
    %373 = vector.load %arg3[%c80, %c0_81] : memref<83x64xf32, #tpu.memory_space<vmem>>, vector<1x64xf32>
    %c81 = arith.constant 81 : index
    %c0_82 = arith.constant 0 : index
    %374 = vector.load %arg3[%c81, %c0_82] : memref<83x64xf32, #tpu.memory_space<vmem>>, vector<1x64xf32>
    %c82 = arith.constant 82 : index
    %c0_83 = arith.constant 0 : index
    %375 = vector.load %arg3[%c82, %c0_83] : memref<83x64xf32, #tpu.memory_space<vmem>>, vector<1x64xf32>
    %376 = vector.extract_strided_slice %375 {offsets = [0, 0], sizes = [1, 1], strides = [1, 1]} : vector<1x64xf32> to vector<1x1xf32>
    %cst_84 = arith.constant dense<0.000000e+00> : vector<8x64xf32>
    %377 = tpu.matmul %370, %371, %cst_84 {dimension_numbers = #tpu.dot_dimension_numbers<[1], [0], [0], [1], [0, 0, 1, 1], [], []>} : vector<8x64xf32>, vector<64x64xf32>, vector<8x64xf32> -> vector<8x64xf32>
    %c0_85 = arith.constant 0 : index
    %c0_86 = arith.constant 0 : index
    %378 = vector.load %arg1[%c0_85, %c0_86] : memref<8x16xf32, #tpu.memory_space<vmem>>, vector<8x16xf32>
    %cst_87 = arith.constant dense<0.000000e+00> : vector<8x64xf32>
    %379 = tpu.matmul %378, %372, %cst_87 {dimension_numbers = #tpu.dot_dimension_numbers<[1], [0], [0], [1], [0, 0, 1, 1], [], []>} : vector<8x16xf32>, vector<16x64xf32>, vector<8x64xf32> -> vector<8x64xf32>
    %380 = arith.addf %377, %379 : vector<8x64xf32>
    %381 = vector.broadcast %374 : vector<1x64xf32> to vector<8x64xf32>
    %382 = arith.addf %380, %381 : vector<8x64xf32>
    %cst_88 = arith.constant 0.000000e+00 : f32
    %383 = vector.broadcast %cst_88 : f32 to vector<8x64xf32>
    %384 = arith.maximumf %382, %383 : vector<8x64xf32>
    %385 = vector.broadcast %373 : vector<1x64xf32> to vector<8x64xf32>
    %386 = arith.mulf %384, %385 : vector<8x64xf32>
    %cst_89 = arith.constant dense<0.000000e+00> : vector<8xf32>
    %387 = vector.multi_reduction <add>, %386, %cst_89 [1] : vector<8x64xf32> to vector<8xf32>
    %388 = vector.shape_cast %387 : vector<8xf32> to vector<8x1xf32>
    %389 = vector.broadcast %376 : vector<1x1xf32> to vector<8x1xf32>
    %390 = arith.addf %388, %389 : vector<8x1xf32>
    %391 = arith.negf %390 : vector<8x1xf32>
    %392 = math.exp %391 : vector<8x1xf32>
    %cst_90 = arith.constant 1.000000e+00 : f32
    %393 = vector.broadcast %cst_90 : f32 to vector<8x1xf32>
    %394 = arith.addf %393, %392 : vector<8x1xf32>
    %395 = arith.divf %393, %394 : vector<8x1xf32>
    %cst_91 = arith.constant 1.000000e-07 : f32
    %cst_92 = arith.constant 0.99999988 : f32
    %396 = vector.broadcast %cst_91 : f32 to vector<8x1xf32>
    %397 = arith.maximumf %396, %395 : vector<8x1xf32>
    %398 = vector.broadcast %cst_92 : f32 to vector<8x1xf32>
    %399 = arith.minimumf %398, %397 : vector<8x1xf32>
    %c0_93 = arith.constant 0 : index
    %c0_94 = arith.constant 0 : index
    %400 = vector.load %arg4[%c0_93, %c0_94] : memref<8x1xf32, #tpu.memory_space<vmem>>, vector<8x1xf32>
    tpu.vector_store %arg4[%c0_93, %c0_94], %399 {strides = array<i32>} : memref<8x1xf32, #tpu.memory_space<vmem>>, vector<8x1xf32>,
    return
  }
}

</mosaic_0001>

<llo_original>
// kernel: stock_lstm_forward.1
$region0: #{stock_lstm_forward.1}
  #allocation0 [shape = 'u32[]', space=smem, size = 0x4, offset = 0x4, fixed_abs, tag = 'smem constant byte address 0x4 - core index']
  #allocation1 [shape = 'u32[144,128]{1,0:T(1,128)}', space=vmem, size = 0x12000, scoped, tag = 'internal scratch']
  %s0 = inlined_call_operand.vmem [shape: f32[8,8,5], index: 0, kind: input, shape index: {}]
  %s1 = inlined_call_operand.vmem [shape: f32[8,16], index: 1, kind: input, shape index: {}]
  %s2 = inlined_call_operand.hbm [shape: f32[202,256], index: 2, kind: input, shape index: {}]
  %s3 = inlined_call_operand.vmem [shape: f32[83,64], index: 3, kind: input, shape index: {}]
  %s4 = inlined_call_operand.vmem [shape: f32[8,1], index: 4, kind: output, shape index: {}]
  %s5 = sld [smem:[#allocation0]]
  $region30: #{stock_lstm_forward.1} parent=0
    _
  %s7 = ssub.s32 1, %s5
  %s8 = scalar_select 0, %s7, %s5
  $region1: #{stock_lstm_forward.1} parent=0
    #allocation2 [shape = 'u8[212992]{0}', space=vmem, size = 0x34000, scoped, tag = 'input window, operand 2, single buffered']
    #allocation3 [shape = 's32[1]{0}', space=sflag, size = 0x4, scoped, tag = 'scoped memory for stock_lstm_forward.1']
    %9 = vsyncpa [#allocation3], 0
    // Predicated region
    $region2: #{stock_lstm_forward.1} parent=1 // pred_check
      _
    $region3: #{stock_lstm_forward.1} parent=1 // pred_check_branch
      %11 = sbr.rel (0) target = $region5
    $region4: #{stock_lstm_forward.1} parent=1 // pred_region
      _
    $region5: #{stock_lstm_forward.1} parent=1 // pred_fallthru
      _
    // Predicated region
    $region6: #{stock_lstm_forward.1} parent=1 // pred_check
      _
    $region7: #{stock_lstm_forward.1} parent=1 // pred_check_branch
      %13 = sbr.rel (0) target = $region9
    $region8: #{stock_lstm_forward.1} parent=1 // pred_region
      _
    $region9: #{stock_lstm_forward.1} parent=1 // pred_fallthru
      _
    // Predicated region
    $region10: #{stock_lstm_forward.1} parent=1 // pred_check
      _
    $region11: #{stock_lstm_forward.1} parent=1 // pred_check_branch
      %15 = sbr.rel (0) target = $region13
    $region12: #{stock_lstm_forward.1} parent=1 // pred_region
      %s17 = ssub.s32 6656, 6656
      %18 = vsyncadd [#allocation3], %s17
      %s19 = sshll.u32 [#allocation2], 4
      %s20 = int_to_ptr.vmem [resolvable:$true] %s19
      %25 = dma.hbm_to_vmem [thread:$0]  %s2, 6656, %s20, [#allocation3], 256, 256, 16
    $region13: #{stock_lstm_forward.1} parent=1 // pred_fallthru
      _
    // Predicated region
    $region14: #{stock_lstm_forward.1} parent=1 // pred_check
      _
    $region15: #{stock_lstm_forward.1} parent=1 // pred_check_branch
      %27 = sbr.rel (0) target = $region17
    $region16: #{stock_lstm_forward.1} parent=1 // pred_region
      _
    $region17: #{stock_lstm_forward.1} parent=1 // pred_fallthru
      _
    // Predicated region
    $region18: #{stock_lstm_forward.1} parent=1 // pred_check
      _
    $region19: #{stock_lstm_forward.1} parent=1 // pred_check_branch
      %29 = sbr.rel (0) target = $region21
    $region20: #{stock_lstm_forward.1} parent=1 // pred_region
      %30 = dma.done [#allocation3], 6656
    $region21: #{stock_lstm_forward.1} parent=1 // pred_fallthru
      _
    %v31 = vld [vmem:[#allocation2] sm:$0x1f]
    %v32 = vld [vmem:[#allocation2 + $0x8] sm:$0x1f]
    %v33 = vld [vmem:[#allocation2 + $0x10] sm:$0xff]
    %v34 = vld [vmem:[#allocation2 + $0x18] sm:$0xff]
    %v35 = vld [vmem:[#allocation2 + $0x20] sm:$0xff]
    %v36 = vld [vmem:[#allocation2 + $0x28] sm:$0xff]
    %v37 = vld [vmem:[#allocation2 + $0x30] sm:$0xff]
    %v38 = vld [vmem:[#allocation2 + $0x38] sm:$0xff]
    %v39 = vld [vmem:[#allocation2 + $0x40] sm:$0xff]
    %v40 = vld [vmem:[#allocation2 + $0x48] sm:$0xff]
    %v41 = vld [vmem:[#allocation2 + $0x50] sm:$0xff]
    %v42 = vld [vmem:[#allocation2 + $0x58] sm:$0xff]
    %v43 = vld [vmem:[#allocation2 + $0x60] sm:$0xff]
    %v44 = vld [vmem:[#allocation2 + $0x68] sm:$0xff]
    %v45 = vld [vmem:[#allocation2 + $0x70] sm:$0xff]
    %v46 = vld [vmem:[#allocation2 + $0x78] sm:$0xff]
    %v47 = vld [vmem:[#allocation2 + $0x80] sm:$0xff]
    %v48 = vld [vmem:[#allocation2 + $0x88] sm:$0xff]
    %v49 = vld [vmem:[#allocation2 + $0x90] sm:$0xff]
    %v50 = vld [vmem:[#allocation2 + $0x98] sm:$0xff]
    %v51 = vld [vmem:[#allocation2 + $0xa0] sm:$0xff]
    %v52 = vld [vmem:[#allocation2 + $0xa8] sm:$0xff]
    %v53 = vld [vmem:[#allocation2 + $0xb0] sm:$0xff]
    %v54 = vld [vmem:[#allocation2 + $0xb8] sm:$0xff]
    %v55 = vld [vmem:[#allocation2 + $0xc0] sm:$0xff]
    %v56 = vld [vmem:[#allocation2 + $0xc8] sm:$0xff]
    %v57 = vld [vmem:[#allocation2 + $0xd0] sm:$0xff]
    %v58 = vld [vmem:[#allocation2 + $0xd8] sm:$0xff]
    %v59 = vld [vmem:[#allocation2 + $0xe0] sm:$0xff]
    %v60 = vld [vmem:[#allocation2 + $0xe8] sm:$0xff]
    %v61 = vld [vmem:[#allocation2 + $0xf0] sm:$0xff]
    %v62 = vld [vmem:[#allocation2 + $0xf8] sm:$0xff]
    %v63 = vld [vmem:[#allocation2 + $0x100] sm:$0xff]
    %v64 = vld [vmem:[#allocation2 + $0x108] sm:$0xff]
    %v65 = vld [vmem:[#allocation2 + $0x110] sm:$0xff]
    %v66 = vld [vmem:[#allocation2 + $0x118] sm:$0xff]
    %v67 = vld [vmem:[#allocation2 + $0x120] sm:$0xff]
    %v68 = vld [vmem:[#allocation2 + $0x128] sm:$0xff]
    %v69 = vld [vmem:[#allocation2 + $0x130] sm:$0xff]
    %v70 = vld [vmem:[#allocation2 + $0x138] sm:$0xff]
    %v71 = vld [vmem:[#allocation2 + $0x140] sm:$0xff]
    %v72 = vld [vmem:[#allocation2 + $0x148] sm:$0xff]
    %v73 = vld [vmem:[#allocation2 + $0x150] sm:$0xff]
    %v74 = vld [vmem:[#allocation2 + $0x158] sm:$0xff]
    %v75 = vld [vmem:[#allocation2 + $0x160] sm:$0xff]
    %v76 = vld [vmem:[#allocation2 + $0x168] sm:$0xff]
    %v77 = vld [vmem:[#allocation2 + $0x170] sm:$0xff]
    %v78 = vld [vmem:[#allocation2 + $0x178] sm:$0xff]
    %v79 = vld [vmem:[#allocation2 + $0x180] sm:$0xff]
    %v80 = vld [vmem:[#allocation2 + $0x188] sm:$0xff]
    %s81 = scalar_lea.vmem [#allocation2], 400
    %v82 = vld [vmem:[%s81] ss:$8 sm:$0x3]
    %s83 = scalar_lea.vmem [#allocation2], 401
    %v84 = vld [vmem:[%s83] ss:$8 sm:$0x3]
    %v85 = vld [vmem:[%s0] sm:$0xff]
    %v86 = vld [vmem:[%s0 + $0x8] sm:$0xff]
    %v87 = vld [vmem:[%s0 + $0x10] sm:$0xff]
    %v88 = vld [vmem:[%s0 + $0x18] sm:$0xff]
    %v89 = vld [vmem:[%s0 + $0x20] sm:$0xff]
    %v90 = vld [vmem:[%s0 + $0x28] sm:$0xff]
    %v91 = vld [vmem:[%s0 + $0x30] sm:$0xff]
    %v92 = vld [vmem:[%s0 + $0x38] sm:$0xff]
    %v101 = vrot.slane %v86, 7
    %vm102 = vcmask 1041409
    %v103 = vsel %vm102, %v101, %v85
    %v104 = vrot.slane %v87, 6
    %vm105 = vcmask 1042434
    %v106 = vsel %vm105, %v104, %v103
    %v107 = vrot.slane %v88, 5
    %vm108 = vcmask 1043459
    %v109 = vsel %vm108, %v107, %v106
    %v110 = vrot.slane %v89, 4
    %vm111 = vcmask 1044484
    %v112 = vsel %vm111, %v110, %v109
    %v113 = vrot.slane %v90, 3
    %vm114 = vcmask 1045509
    %v115 = vsel %vm114, %v113, %v112
    %v116 = vrot.slane %v91, 2
    %vm117 = vcmask 1046534
    %v118 = vsel %vm117, %v116, %v115
    %v119 = vrot.slane %v92, 1
    %vm120 = vcmask 1047559
    %v121 = vsel %vm120, %v119, %v118
    %v122 = vrot.slane %v85, 1
    %v123 = vsel %vm102, %v86, %v122
    %v124 = vrot.slane %v87, 7
    %v125 = vsel %vm105, %v124, %v123
    %v126 = vrot.slane %v88, 6
    %v127 = vsel %vm108, %v126, %v125
    %v128 = vrot.slane %v89, 5
    %v129 = vsel %vm111, %v128, %v127
    %v130 = vrot.slane %v90, 4
    %v131 = vsel %vm114, %v130, %v129
    %v132 = vrot.slane %v91, 3
    %v133 = vsel %vm117, %v132, %v131
    %v134 = vrot.slane %v92, 2
    %v135 = vsel %vm120, %v134, %v133
    %v136 = vrot.slane %v85, 2
    %v137 = vrot.slane %v86, 1
    %v138 = vsel %vm102, %v137, %v136
    %v139 = vsel %vm105, %v87, %v138
    %v140 = vrot.slane %v88, 7
    %v141 = vsel %vm108, %v140, %v139
    %v142 = vrot.slane %v89, 6
    %v143 = vsel %vm111, %v142, %v141
    %v144 = vrot.slane %v90, 5
    %v145 = vsel %vm114, %v144, %v143
    %v146 = vrot.slane %v91, 4
    %v147 = vsel %vm117, %v146, %v145
    %v148 = vrot.slane %v92, 3
    %v149 = vsel %vm120, %v148, %v147
    %v150 = vrot.slane %v85, 3
    %v151 = vrot.slane %v86, 2
    %v152 = vsel %vm102, %v151, %v150
    %v153 = vrot.slane %v87, 1
    %v154 = vsel %vm105, %v153, %v152
    %v155 = vsel %vm108, %v88, %v154
    %v156 = vrot.slane %v89, 7
    %v157 = vsel %vm111, %v156, %v155
    %v158 = vrot.slane %v90, 6
    %v159 = vsel %vm114, %v158, %v157
    %v160 = vrot.slane %v91, 5
    %v161 = vsel %vm117, %v160, %v159
    %v162 = vrot.slane %v92, 4
    %v163 = vsel %vm120, %v162, %v161
    %v164 = vrot.slane %v85, 4
    %v165 = vrot.slane %v86, 3
    %v166 = vsel %vm102, %v165, %v164
    %v167 = vrot.slane %v87, 2
    %v168 = vsel %vm105, %v167, %v166
    %v169 = vrot.slane %v88, 1
    %v170 = vsel %vm108, %v169, %v168
    %v171 = vsel %vm111, %v89, %v170
    %v172 = vrot.slane %v90, 7
    %v173 = vsel %vm114, %v172, %v171
    %v174 = vrot.slane %v91, 6
    %v175 = vsel %vm117, %v174, %v173
    %v176 = vrot.slane %v92, 5
    %v177 = vsel %vm120, %v176, %v175
    %v178 = vrot.slane %v85, 5
    %v179 = vrot.slane %v86, 4
    %v180 = vsel %vm102, %v179, %v178
    %v181 = vrot.slane %v87, 3
    %v182 = vsel %vm105, %v181, %v180
    %v183 = vrot.slane %v88, 2
    %v184 = vsel %vm108, %v183, %v182
    %v185 = vrot.slane %v89, 1
    %v186 = vsel %vm111, %v185, %v184
    %v187 = vsel %vm114, %v90, %v186
    %v188 = vrot.slane %v91, 7
    %v189 = vsel %vm117, %v188, %v187
    %v190 = vrot.slane %v92, 6
    %v191 = vsel %vm120, %v190, %v189
    %v192 = vrot.slane %v85, 6
    %v193 = vrot.slane %v86, 5
    %v194 = vsel %vm102, %v193, %v192
    %v195 = vrot.slane %v87, 4
    %v196 = vsel %vm105, %v195, %v194
    %v197 = vrot.slane %v88, 3
    %v198 = vsel %vm108, %v197, %v196
    %v199 = vrot.slane %v89, 2
    %v200 = vsel %vm111, %v199, %v198
    %v201 = vrot.slane %v90, 1
    %v202 = vsel %vm114, %v201, %v200
    %v203 = vsel %vm117, %v91, %v202
    %v204 = vrot.slane %v92, 7
    %v205 = vsel %vm120, %v204, %v203
    %v206 = vrot.slane %v85, 7
    %v207 = vrot.slane %v86, 6
    %v208 = vsel %vm102, %v207, %v206
    %v209 = vrot.slane %v87, 5
    %v210 = vsel %vm105, %v209, %v208
    %v211 = vrot.slane %v88, 4
    %v212 = vsel %vm108, %v211, %v210
    %v213 = vrot.slane %v89, 3
    %v214 = vsel %vm111, %v213, %v212
    %v215 = vrot.slane %v90, 2
    %v216 = vsel %vm114, %v215, %v214
    %v217 = vrot.slane %v91, 1
    %v218 = vsel %vm117, %v217, %v216
    %v219 = vsel %vm120, %v92, %v218
    %v221 = vlaneseq
    %v222 = vshrl.u32 %v221, 7
    %v223 = vsub.s32 0, %v222
    %v224 = vrot.slane %v82, %v223
    %v225 = vlaneseq
    %v226 = vshrl.u32 %v225, 7
    %v227 = vsub.s32 1, %v226
    %v228 = vrot.slane %v82, %v227
    %vm231 = vcmask 39936
    %v232 = vsel %vm231, %v121, 0
    %v234 = vsel %vm231, %v135, 0
    %v236 = vsel %vm231, %v149, 0
    %v238 = vsel %vm231, %v163, 0
    %v240 = vsel %vm231, %v177, 0
    %v242 = vsel %vm231, %v191, 0
    %v244 = vsel %vm231, %v205, 0
    %v246 = vsel %vm231, %v219, 0
    %vm248 = vcmask 1044480
    %v250 = vsel %vm248, %v31, 0
    %v253 = vsel %vm248, %v32, 0
    %255 = vmatprep.subr.mxu0 %v253
    %256 = vmatpush1.msra.mxu0 %v250
    %257 = vmatprep.subr.mxu0 0.0
    %258 = vmatpush1.msra.mxu0 0.0
    %259 = vmatprep.subr.mxu0 0.0
    %260 = vmatpush1.msra.mxu0 0.0
    %261 = vmatprep.subr.mxu0 0.0
    %262 = vmatpush1.msra.mxu0 0.0
    %263 = vmatprep.subr.mxu0 0.0
    %264 = vmatpush1.msra.mxu0 0.0
    %265 = vmatprep.subr.mxu0 0.0
    %266 = vmatpush1.msra.mxu0 0.0
    %267 = vmatprep.subr.mxu0 0.0
    %268 = vmatpush1.msra.mxu0 0.0
    %269 = vmatprep.subr.mxu0 0.0
    %270 = vmatpush1.msra.mxu0 0.0
    %271 = vmatprep.subr.mxu0 0.0
    %272 = vmatpush1.msra.mxu0 0.0
    %273 = vmatprep.subr.mxu0 0.0
    %274 = vmatpush1.msra.mxu0 0.0
    %275 = vmatprep.subr.mxu0 0.0
    %276 = vmatpush1.msra.mxu0 0.0
    %277 = vmatprep.subr.mxu0 0.0
    %278 = vmatpush1.msra.mxu0 0.0
    %279 = vmatprep.subr.mxu0 0.0
    %280 = vmatpush1.msra.mxu0 0.0
    %281 = vmatprep.subr.mxu0 0.0
    %282 = vmatpush1.msra.mxu0 0.0
    %283 = vmatprep.subr.mxu0 0.0
    %284 = vmatpush1.msra.mxu0 0.0
    %285 = vmatprep.subr.mxu0 0.0
    %286 = vmatpush1.msra.mxu0 0.0
    %287 = vmatprep.subr.mxu0 0.0
    %288 = vmatpush1.msra.mxu0 0.0
    %289 = vmatprep.subr.mxu0 0.0
    %290 = vmatpush1.msra.mxu0 0.0
    %291 = vmatprep.subr.mxu0 0.0
    %292 = vmatpush1.msra.mxu0 0.0
    %293 = vmatprep.subr.mxu0 0.0
    %294 = vmatpush1.msra.mxu0 0.0
    %295 = vmatprep.subr.mxu0 0.0
    %296 = vmatpush1.msra.mxu0 0.0
    %297 = vmatprep.subr.mxu0 0.0
    %298 = vmatpush1.msra.mxu0 0.0
    %299 = vmatprep.subr.mxu0 0.0
    %300 = vmatpush1.msra.mxu0 0.0
    %301 = vmatprep.subr.mxu0 0.0
    %302 = vmatpush1.msra.mxu0 0.0
    %303 = vmatprep.subr.mxu0 0.0
    %304 = vmatpush1.msra.mxu0 0.0
    %305 = vmatprep.subr.mxu0 0.0
    %306 = vmatpush1.msra.mxu0 0.0
    %307 = vmatprep.subr.mxu0 0.0
    %308 = vmatpush1.msra.mxu0 0.0
    %309 = vmatprep.subr.mxu0 0.0
    %310 = vmatpush1.msra.mxu0 0.0
    %311 = vmatprep.subr.mxu0 0.0
    %312 = vmatpush1.msra.mxu0 0.0
    %313 = vmatprep.subr.mxu0 0.0
    %314 = vmatpush1.msra.mxu0 0.0
    %315 = vmatprep.subr.mxu0 0.0
    %316 = vmatpush1.msra.mxu0 0.0
    %317 = vmatprep.subr.mxu0 0.0
    %318 = vmatpush1.msra.mxu0 0.0
    %319 = vmatprep.mubr.f32.mxu0 0.0
    %320 = vmatmul.mubr.f32.gmra.mrb[0].mxu0 %v232
    %v321 = vpop.f32.mrb[0].mxu0
    %v322 = vadd.f32 %v224, %v321
    %v323 = vpop.f32.mrb[0].mxu0
    %v324 = vadd.f32 %v228, %v323
    %325 = vmatprep.mubr.f32.mxu0 0.0
    %326 = vmatmul.mubr.f32.gmra.mrb[0].mxu0 %v234
    %v327 = vpop.f32.mrb[0].mxu0
    %v328 = vadd.f32 %v224, %v327
    %v329 = vpop.f32.mrb[0].mxu0
    %v330 = vadd.f32 %v228, %v329
    %331 = vmatprep.mubr.f32.mxu0 0.0
    %332 = vmatmul.mubr.f32.gmra.mrb[0].mxu0 %v236
    %v333 = vpop.f32.mrb[0].mxu0
    %v334 = vadd.f32 %v224, %v333
    %v335 = vpop.f32.mrb[0].mxu0
    %v336 = vadd.f32 %v228, %v335
    %337 = vmatprep.mubr.f32.mxu0 0.0
    %338 = vmatmul.mubr.f32.gmra.mrb[0].mxu0 %v238
    %v339 = vpop.f32.mrb[0].mxu0
    %v340 = vadd.f32 %v224, %v339
    %v341 = vpop.f32.mrb[0].mxu0
    %v342 = vadd.f32 %v228, %v341
    %343 = vmatprep.mubr.f32.mxu0 0.0
    %344 = vmatmul.mubr.f32.gmra.mrb[0].mxu0 %v240
    %v345 = vpop.f32.mrb[0].mxu0
    %v346 = vadd.f32 %v224, %v345
    %v347 = vpop.f32.mrb[0].mxu0
    %v348 = vadd.f32 %v228, %v347
    %349 = vmatprep.mubr.f32.mxu0 0.0
    %350 = vmatmul.mubr.f32.gmra.mrb[0].mxu0 %v242
    %v351 = vpop.f32.mrb[0].mxu0
    %v352 = vadd.f32 %v224, %v351
    %v353 = vpop.f32.mrb[0].mxu0
    %v354 = vadd.f32 %v228, %v353
    %355 = vmatprep.mubr.f32.mxu0 0.0
    %356 = vmatmul.mubr.f32.gmra.mrb[0].mxu0 %v244
    %v357 = vpop.f32.mrb[0].mxu0
    %v358 = vadd.f32 %v224, %v357
    %v359 = vpop.f32.mrb[0].mxu0
    %v360 = vadd.f32 %v228, %v359
    %361 = vmatprep.mubr.f32.mxu0 0.0
    %362 = vmatmul.mubr.f32.gmra.mrb[0].mxu0 %v246
    %v363 = vpop.f32.mrb[0].mxu0
    %v364 = vadd.f32 %v224, %v363
    %v365 = vpop.f32.mrb[0].mxu0
    %v366 = vadd.f32 %v228, %v365
    %367 = vdwg.mxu0
    %vm368 = vcmask 523264
    %v370 = vsel %vm368, 0.0, 0
    %372 = vmatprep.subr.mxu0 %v34
    %373 = vmatpush1.msra.mxu0 %v33
    %374 = vmatprep.subr.mxu0 %v36
    %375 = vmatpush1.msra.mxu0 %v35
    %376 = vmatprep.subr.mxu0 %v38
    %377 = vmatpush1.msra.mxu0 %v37
    %378 = vmatprep.subr.mxu0 %v40
    %379 = vmatpush1.msra.mxu0 %v39
    %380 = vmatprep.subr.mxu0 %v42
    %381 = vmatpush1.msra.mxu0 %v41
    %382 = vmatprep.subr.mxu0 %v44
    %383 = vmatpush1.msra.mxu0 %v43
    %384 = vmatprep.subr.mxu0 %v46
    %385 = vmatpush1.msra.mxu0 %v45
    %386 = vmatprep.subr.mxu0 %v48
    %387 = vmatpush1.msra.mxu0 %v47
    %388 = vmatprep.subr.mxu0 0.0
    %389 = vmatpush1.msra.mxu0 0.0
    %390 = vmatprep.subr.mxu0 0.0
    %391 = vmatpush1.msra.mxu0 0.0
    %392 = vmatprep.subr.mxu0 0.0
    %393 = vmatpush1.msra.mxu0 0.0
    %394 = vmatprep.subr.mxu0 0.0
    %395 = vmatpush1.msra.mxu0 0.0
    %396 = vmatprep.subr.mxu0 0.0
    %397 = vmatpush1.msra.mxu0 0.0
    %398 = vmatprep.subr.mxu0 0.0
    %399 = vmatpush1.msra.mxu0 0.0
    %400 = vmatprep.subr.mxu0 0.0
    %401 = vmatpush1.msra.mxu0 0.0
    %402 = vmatprep.subr.mxu0 0.0
    %403 = vmatpush1.msra.mxu0 0.0
    %404 = vmatprep.subr.mxu0 0.0
    %405 = vmatpush1.msra.mxu0 0.0
    %406 = vmatprep.subr.mxu0 0.0
    %407 = vmatpush1.msra.mxu0 0.0
    %408 = vmatprep.subr.mxu0 0.0
    %409 = vmatpush1.msra.mxu0 0.0
    %410 = vmatprep.subr.mxu0 0.0
    %411 = vmatpush1.msra.mxu0 0.0
    %412 = vmatprep.subr.mxu0 0.0
    %413 = vmatpush1.msra.mxu0 0.0
    %414 = vmatprep.subr.mxu0 0.0
    %415 = vmatpush1.msra.mxu0 0.0
    %416 = vmatprep.subr.mxu0 0.0
    %417 = vmatpush1.msra.mxu0 0.0
    %418 = vmatprep.subr.mxu0 0.0
    %419 = vmatpush1.msra.mxu0 0.0
    %420 = vmatprep.subr.mxu0 0.0
    %421 = vmatpush1.msra.mxu0 0.0
    %422 = vmatprep.subr.mxu0 0.0
    %423 = vmatpush1.msra.mxu0 0.0
    %424 = vmatprep.subr.mxu0 0.0
    %425 = vmatpush1.msra.mxu0 0.0
    %426 = vmatprep.subr.mxu0 0.0
    %427 = vmatpush1.msra.mxu0 0.0
    %428 = vmatprep.subr.mxu0 0.0
    %429 = vmatpush1.msra.mxu0 0.0
    %430 = vmatprep.subr.mxu0 0.0
    %431 = vmatpush1.msra.mxu0 0.0
    %432 = vmatprep.subr.mxu0 0.0
    %433 = vmatpush1.msra.mxu0 0.0
    %434 = vmatprep.subr.mxu0 0.0
    %435 = vmatpush1.msra.mxu0 0.0
    %436 = vmatprep.mubr.f32.mxu0 0.0
    %437 = vmatmul.mubr.f32.gmra.mrb[0].mxu0 %v370
    %v438 = vpop.f32.mrb[0].mxu0
    %v439 = vadd.f32 0.0, %v438
    %v440 = vpop.f32.mrb[0].mxu0
    %v441 = vadd.f32 0.0, %v440
    %442 = vdwg.mxu0
    %v443 = vadd.f32 %v322, %v439
    %v444 = vadd.f32 %v324, %v441
    %v445 = vxor.u32 %v443, 2147483648
    %v446 = vxor.u32 %v444, 2147483648
    %v447 = vmul.f32 %v445, 1.442695
    %v448 = vpow.pop %v447
    %v449 = vmul.f32 %v446, 1.442695
    %v450 = vpow.pop %v449
    %v451 = vadd.f32 %v448, 1.0
    %v452 = vadd.f32 %v450, 1.0
    %v453 = vrcp.pop %v451
    %v454 = vmul.f32 1.0, %v453
    %v455 = vrcp.pop %v452
    %v456 = vmul.f32 1.0, %v455
    %v457 = vmul.f32 %v456, 2.0
    %v458 = vsub.f32 %v457, 1.0
    %v459 = vmul.f32 %v454, 0.0
    %v460 = vmul.f32 %v454, %v458
    %462 = vrot.lane.b32.xlu0 %v460, 64
    %v463 = vpop.permute.xlu0 %462
    %v465 = vadd.f32 %v459, %v463
    %v466 = vtanh.pop %v465
    %v467 = vmul.f32 %v456, %v466
    %469 = vrot.lane.b32.xlu0 %v467, 64
    %v470 = vpop.permute.xlu0 %469
    %v471 = vsel %vm368, %v470, 0
    %473 = vmatprep.subr.mxu0 %v34
    %474 = vmatpush1.msra.mxu0 %v33
    %475 = vmatprep.subr.mxu0 %v36
    %476 = vmatpush1.msra.mxu0 %v35
    %477 = vmatprep.subr.mxu0 %v38
    %478 = vmatpush1.msra.mxu0 %v37
    %479 = vmatprep.subr.mxu0 %v40
    %480 = vmatpush1.msra.mxu0 %v39
    %481 = vmatprep.subr.mxu0 %v42
    %482 = vmatpush1.msra.mxu0 %v41
    %483 = vmatprep.subr.mxu0 %v44
    %484 = vmatpush1.msra.mxu0 %v43
    %485 = vmatprep.subr.mxu0 %v46
    %486 = vmatpush1.msra.mxu0 %v45
    %487 = vmatprep.subr.mxu0 %v48
    %488 = vmatpush1.msra.mxu0 %v47
    %489 = vmatprep.subr.mxu0 0.0
    %490 = vmatpush1.msra.mxu0 0.0
    %491 = vmatprep.subr.mxu0 0.0
    %492 = vmatpush1.msra.mxu0 0.0
    %493 = vmatprep.subr.mxu0 0.0
    %494 = vmatpush1.msra.mxu0 0.0
    %495 = vmatprep.subr.mxu0 0.0
    %496 = vmatpush1.msra.mxu0 0.0
    %497 = vmatprep.subr.mxu0 0.0
    %498 = vmatpush1.msra.mxu0 0.0
    %499 = vmatprep.subr.mxu0 0.0
    %500 = vmatpush1.msra.mxu0 0.0
    %501 = vmatprep.subr.mxu0 0.0
    %502 = vmatpush1.msra.mxu0 0.0
    %503 = vmatprep.subr.mxu0 0.0
    %504 = vmatpush1.msra.mxu0 0.0
    %505 = vmatprep.subr.mxu0 0.0
    %506 = vmatpush1.msra.mxu0 0.0
    %507 = vmatprep.subr.mxu0 0.0
    %508 = vmatpush1.msra.mxu0 0.0
    %509 = vmatprep.subr.mxu0 0.0
    %510 = vmatpush1.msra.mxu0 0.0
    %511 = vmatprep.subr.mxu0 0.0
    %512 = vmatpush1.msra.mxu0 0.0
    %513 = vmatprep.subr.mxu0 0.0
    %514 = vmatpush1.msra.mxu0 0.0
    %515 = vmatprep.subr.mxu0 0.0
    %516 = vmatpush1.msra.mxu0 0.0
    %517 = vmatprep.subr.mxu0 0.0
    %518 = vmatpush1.msra.mxu0 0.0
    %519 = vmatprep.subr.mxu0 0.0
    %520 = vmatpush1.msra.mxu0 0.0
    %521 = vmatprep.subr.mxu0 0.0
    %522 = vmatpush1.msra.mxu0 0.0
    %523 = vmatprep.subr.mxu0 0.0
    %524 = vmatpush1.msra.mxu0 0.0
    %525 = vmatprep.subr.mxu0 0.0
    %526 = vmatpush1.msra.mxu0 0.0
    %527 = vmatprep.subr.mxu0 0.0
    %528 = vmatpush1.msra.mxu0 0.0
    %529 = vmatprep.subr.mxu0 0.0
    %530 = vmatpush1.msra.mxu0 0.0
    %531 = vmatprep.subr.mxu0 0.0
    %532 = vmatpush1.msra.mxu0 0.0
    %533 = vmatprep.subr.mxu0 0.0
    %534 = vmatpush1.msra.mxu0 0.0
    %535 = vmatprep.subr.mxu0 0.0
    %536 = vmatpush1.msra.mxu0 0.0
    %537 = vmatprep.mubr.f32.mxu0 0.0
    %538 = vmatmul.mubr.f32.gmra.mrb[0].mxu0 %v471
    %v539 = vpop.f32.mrb[0].mxu0
    %v540 = vadd.f32 0.0, %v539
    %v541 = vpop.f32.mrb[0].mxu0
    %v542 = vadd.f32 0.0, %v541
    %543 = vdwg.mxu0
    %v544 = vadd.f32 %v328, %v540
    %v545 = vadd.f32 %v330, %v542
    %v546 = vxor.u32 %v544, 2147483648
    %v547 = vxor.u32 %v545, 2147483648
    %v548 = vmul.f32 %v546, 1.442695
    %v549 = vpow.pop %v548
    %v550 = vmul.f32 %v547, 1.442695
    %v551 = vpow.pop %v550
    %v552 = vadd.f32 %v549, 1.0
    %v553 = vadd.f32 %v551, 1.0
    %v554 = vrcp.pop %v552
    %v555 = vmul.f32 1.0, %v554
    %v556 = vrcp.pop %v553
    %v557 = vmul.f32 1.0, %v556
    %v558 = vmul.f32 %v557, 2.0
    %v559 = vsub.f32 %v558, 1.0
    %v560 = vmul.f32 %v555, %v465
    %v561 = vmul.f32 %v555, %v559
    %563 = vrot.lane.b32.xlu0 %v561, 64
    %v564 = vpop.permute.xlu0 %563
    %v566 = vadd.f32 %v560, %v564
    %v567 = vtanh.pop %v566
    %v568 = vmul.f32 %v557, %v567
    %570 = vrot.lane.b32.xlu0 %v568, 64
    %v571 = vpop.permute.xlu0 %570
    %v572 = vsel %vm368, %v571, 0
    %574 = vmatprep.subr.mxu0 %v34
    %575 = vmatpush1.msra.mxu0 %v33
    %576 = vmatprep.subr.mxu0 %v36
    %577 = vmatpush1.msra.mxu0 %v35
    %578 = vmatprep.subr.mxu0 %v38
    %579 = vmatpush1.msra.mxu0 %v37
    %580 = vmatprep.subr.mxu0 %v40
    %581 = vmatpush1.msra.mxu0 %v39
    %582 = vmatprep.subr.mxu0 %v42
    %583 = vmatpush1.msra.mxu0 %v41
    %584 = vmatprep.subr.mxu0 %v44
    %585 = vmatpush1.msra.mxu0 %v43
    %586 = vmatprep.subr.mxu0 %v46
    %587 = vmatpush1.msra.mxu0 %v45
    %588 = vmatprep.subr.mxu0 %v48
    %589 = vmatpush1.msra.mxu0 %v47
    %590 = vmatprep.subr.mxu0 0.0
    %591 = vmatpush1.msra.mxu0 0.0
    %592 = vmatprep.subr.mxu0 0.0
    %593 = vmatpush1.msra.mxu0 0.0
    %594 = vmatprep.subr.mxu0 0.0
    %595 = vmatpush1.msra.mxu0 0.0
    %596 = vmatprep.subr.mxu0 0.0
    %597 = vmatpush1.msra.mxu0 0.0
    %598 = vmatprep.subr.mxu0 0.0
    %599 = vmatpush1.msra.mxu0 0.0
    %600 = vmatprep.subr.mxu0 0.0
    %601 = vmatpush1.msra.mxu0 0.0
    %602 = vmatprep.subr.mxu0 0.0
    %603 = vmatpush1.msra.mxu0 0.0
    %604 = vmatprep.subr.mxu0 0.0
    %605 = vmatpush1.msra.mxu0 0.0
    %606 = vmatprep.subr.mxu0 0.0
    %607 = vmatpush1.msra.mxu0 0.0
    %608 = vmatprep.subr.mxu0 0.0
    %609 = vmatpush1.msra.mxu0 0.0
    %610 = vmatprep.subr.mxu0 0.0
    %611 = vmatpush1.msra.mxu0 0.0
    %612 = vmatprep.subr.mxu0 0.0
    %613 = vmatpush1.msra.mxu0 0.0
    %614 = vmatprep.subr.mxu0 0.0
    %615 = vmatpush1.msra.mxu0 0.0
    %616 = vmatprep.subr.mxu0 0.0
    %617 = vmatpush1.msra.mxu0 0.0
    %618 = vmatprep.subr.mxu0 0.0
    %619 = vmatpush1.msra.mxu0 0.0
    %620 = vmatprep.subr.mxu0 0.0
    %621 = vmatpush1.msra.mxu0 0.0
    %622 = vmatprep.subr.mxu0 0.0
    %623 = vmatpush1.msra.mxu0 0.0
    %624 = vmatprep.subr.mxu0 0.0
    %625 = vmatpush1.msra.mxu0 0.0
    %626 = vmatprep.subr.mxu0 0.0
    %627 = vmatpush1.msra.mxu0 0.0
    %628 = vmatprep.subr.mxu0 0.0
    %629 = vmatpush1.msra.mxu0 0.0
    %630 = vmatprep.subr.mxu0 0.0
    %631 = vmatpush1.msra.mxu0 0.0
    %632 = vmatprep.subr.mxu0 0.0
    %633 = vmatpush1.msra.mxu0 0.0
    %634 = vmatprep.subr.mxu0 0.0
    %635 = vmatpush1.msra.mxu0 0.0
    %636 = vmatprep.subr.mxu0 0.0
    %637 = vmatpush1.msra.mxu0 0.0
    %638 = vmatprep.mubr.f32.mxu0 0.0
    %639 = vmatmul.mubr.f32.gmra.mrb[0].mxu0 %v572
    %v640 = vpop.f32.mrb[0].mxu0
    %v641 = vadd.f32 0.0, %v640
    %v642 = vpop.f32.mrb[0].mxu0
    %v643 = vadd.f32 0.0, %v642
    %644 = vdwg.mxu0
    %v645 = vadd.f32 %v334, %v641
    %v646 = vadd.f32 %v336, %v643
    %v647 = vxor.u32 %v645, 2147483648
    %v648 = vxor.u32 %v646, 2147483648
    %v649 = vmul.f32 %v647, 1.442695
    %v650 = vpow.pop %v649
    %v651 = vmul.f32 %v648, 1.442695
    %v652 = vpow.pop %v651
    %v653 = vadd.f32 %v650, 1.0
    %v654 = vadd.f32 %v652, 1.0
    %v655 = vrcp.pop %v653
    %v656 = vmul.f32 1.0, %v655
    %v657 = vrcp.pop %v654
    %v658 = vmul.f32 1.0, %v657
    %v659 = vmul.f32 %v658, 2.0
    %v660 = vsub.f32 %v659, 1.0
    %v661 = vmul.f32 %v656, %v566
    %v662 = vmul.f32 %v656, %v660
    %664 = vrot.lane.b32.xlu0 %v662, 64
    %v665 = vpop.permute.xlu0 %664
    %v667 = vadd.f32 %v661, %v665
    %v668 = vtanh.pop %v667
    %v669 = vmul.f32 %v658, %v668
    %671 = vrot.lane.b32.xlu0 %v669, 64
    %v672 = vpop.permute.xlu0 %671
    %v673 = vsel %vm368, %v672, 0
    %675 = vmatprep.subr.mxu0 %v34
    %676 = vmatpush1.msra.mxu0 %v33
    %677 = vmatprep.subr.mxu0 %v36
    %678 = vmatpush1.msra.mxu0 %v35
    %679 = vmatprep.subr.mxu0 %v38
    %680 = vmatpush1.msra.mxu0 %v37
    %681 = vmatprep.subr.mxu0 %v40
    %682 = vmatpush1.msra.mxu0 %v39
    %683 = vmatprep.subr.mxu0 %v42
    %684 = vmatpush1.msra.mxu0 %v41
    %685 = vmatprep.subr.mxu0 %v44
    %686 = vmatpush1.msra.mxu0 %v43
    %687 = vmatprep.subr.mxu0 %v46
    %688 = vmatpush1.msra.mxu0 %v45
    %689 = vmatprep.subr.mxu0 %v48
    %690 = vmatpush1.msra.mxu0 %v47
    %691 = vmatprep.subr.mxu0 0.0
    %692 = vmatpush1.msra.mxu0 0.0
    %693 = vmatprep.subr.mxu0 0.0
    %694 = vmatpush1.msra.mxu0 0.0
    %695 = vmatprep.subr.mxu0 0.0
    %696 = vmatpush1.msra.mxu0 0.0
    %697 = vmatprep.subr.mxu0 0.0
    %698 = vmatpush1.msra.mxu0 0.0
    %699 = vmatprep.subr.mxu0 0.0
    %700 = vmatpush1.msra.mxu0 0.0
    %701 = vmatprep.subr.mxu0 0.0
    %702 = vmatpush1.msra.mxu0 0.0
    %703 = vmatprep.subr.mxu0 0.0
    %704 = vmatpush1.msra.mxu0 0.0
    %705 = vmatprep.subr.mxu0 0.0
    %706 = vmatpush1.msra.mxu0 0.0
    %707 = vmatprep.subr.mxu0 0.0
    %708 = vmatpush1.msra.mxu0 0.0
    %709 = vmatprep.subr.mxu0 0.0
    %710 = vmatpush1.msra.mxu0 0.0
    %711 = vmatprep.subr.mxu0 0.0
    %712 = vmatpush1.msra.mxu0 0.0
    %713 = vmatprep.subr.mxu0 0.0
    %714 = vmatpush1.msra.mxu0 0.0
    %715 = vmatprep.subr.mxu0 0.0
    %716 = vmatpush1.msra.mxu0 0.0
    %717 = vmatprep.subr.mxu0 0.0
    %718 = vmatpush1.msra.mxu0 0.0
    %719 = vmatprep.subr.mxu0 0.0
    %720 = vmatpush1.msra.mxu0 0.0
    %721 = vmatprep.subr.mxu0 0.0
    %722 = vmatpush1.msra.mxu0 0.0
    %723 = vmatprep.subr.mxu0 0.0
    %724 = vmatpush1.msra.mxu0 0.0
    %725 = vmatprep.subr.mxu0 0.0
    %726 = vmatpush1.msra.mxu0 0.0
    %727 = vmatprep.subr.mxu0 0.0
    %728 = vmatpush1.msra.mxu0 0.0
    %729 = vmatprep.subr.mxu0 0.0
    %730 = vmatpush1.msra.mxu0 0.0
    %731 = vmatprep.subr.mxu0 0.0
    %732 = vmatpush1.msra.mxu0 0.0
    %733 = vmatprep.subr.mxu0 0.0
    %734 = vmatpush1.msra.mxu0 0.0
    %735 = vmatprep.subr.mxu0 0.0
    %736 = vmatpush1.msra.mxu0 0.0
    %737 = vmatprep.subr.mxu0 0.0
    %738 = vmatpush1.msra.mxu0 0.0
    %739 = vmatprep.mubr.f32.mxu0 0.0
    %740 = vmatmul.mubr.f32.gmra.mrb[0].mxu0 %v673
    %v741 = vpop.f32.mrb[0].mxu0
    %v742 = vadd.f32 0.0, %v741
    %v743 = vpop.f32.mrb[0].mxu0
    %v744 = vadd.f32 0.0, %v743
    %745 = vdwg.mxu0
    %v746 = vadd.f32 %v340, %v742
    %v747 = vadd.f32 %v342, %v744
    %v748 = vxor.u32 %v746, 2147483648
    %v749 = vxor.u32 %v747, 2147483648
    %v750 = vmul.f32 %v748, 1.442695
    %v751 = vpow.pop %v750
    %v752 = vmul.f32 %v749, 1.442695
    %v753 = vpow.pop %v752
    %v754 = vadd.f32 %v751, 1.0
    %v755 = vadd.f32 %v753, 1.0
    %v756 = vrcp.pop %v754
    %v757 = vmul.f32 1.0, %v756
    %v758 = vrcp.pop %v755
    %v759 = vmul.f32 1.0, %v758
    %v760 = vmul.f32 %v759, 2.0
    %v761 = vsub.f32 %v760, 1.0
    %v762 = vmul.f32 %v757, %v667
    %v763 = vmul.f32 %v757, %v761
    %765 = vrot.lane.b32.xlu0 %v763, 64
    %v766 = vpop.permute.xlu0 %765
    %v768 = vadd.f32 %v762, %v766
    %v769 = vtanh.pop %v768
    %v770 = vmul.f32 %v759, %v769
    %772 = vrot.lane.b32.xlu0 %v770, 64
    %v773 = vpop.permute.xlu0 %772
    %v774 = vsel %vm368, %v773, 0
    %776 = vmatprep.subr.mxu0 %v34
    %777 = vmatpush1.msra.mxu0 %v33
    %778 = vmatprep.subr.mxu0 %v36
    %779 = vmatpush1.msra.mxu0 %v35
    %780 = vmatprep.subr.mxu0 %v38
    %781 = vmatpush1.msra.mxu0 %v37
    %782 = vmatprep.subr.mxu0 %v40
    %783 = vmatpush1.msra.mxu0 %v39
    %784 = vmatprep.subr.mxu0 %v42
    %785 = vmatpush1.msra.mxu0 %v41
    %786 = vmatprep.subr.mxu0 %v44
    %787 = vmatpush1.msra.mxu0 %v43
    %788 = vmatprep.subr.mxu0 %v46
    %789 = vmatpush1.msra.mxu0 %v45
    %790 = vmatprep.subr.mxu0 %v48
    %791 = vmatpush1.msra.mxu0 %v47
    %792 = vmatprep.subr.mxu0 0.0
    %793 = vmatpush1.msra.mxu0 0.0
    %794 = vmatprep.subr.mxu0 0.0
    %795 = vmatpush1.msra.mxu0 0.0
    %796 = vmatprep.subr.mxu0 0.0
    %797 = vmatpush1.msra.mxu0 0.0
    %798 = vmatprep.subr.mxu0 0.0
    %799 = vmatpush1.msra.mxu0 0.0
    %800 = vmatprep.subr.mxu0 0.0
    %801 = vmatpush1.msra.mxu0 0.0
    %802 = vmatprep.subr.mxu0 0.0
    %803 = vmatpush1.msra.mxu0 0.0
    %804 = vmatprep.subr.mxu0 0.0
    %805 = vmatpush1.msra.mxu0 0.0
    %806 = vmatprep.subr.mxu0 0.0
    %807 = vmatpush1.msra.mxu0 0.0
    %808 = vmatprep.subr.mxu0 0.0
    %809 = vmatpush1.msra.mxu0 0.0
    %810 = vmatprep.subr.mxu0 0.0
    %811 = vmatpush1.msra.mxu0 0.0
    %812 = vmatprep.subr.mxu0 0.0
    %813 = vmatpush1.msra.mxu0 0.0
    %814 = vmatprep.subr.mxu0 0.0
    %815 = vmatpush1.msra.mxu0 0.0
    %816 = vmatprep.subr.mxu0 0.0
    %817 = vmatpush1.msra.mxu0 0.0
    %818 = vmatprep.subr.mxu0 0.0
    %819 = vmatpush1.msra.mxu0 0.0
    %820 = vmatprep.subr.mxu0 0.0
    %821 = vmatpush1.msra.mxu0 0.0
    %822 = vmatprep.subr.mxu0 0.0
    %823 = vmatpush1.msra.mxu0 0.0
    %824 = vmatprep.subr.mxu0 0.0
    %825 = vmatpush1.msra.mxu0 0.0
    %826 = vmatprep.subr.mxu0 0.0
    %827 = vmatpush1.msra.mxu0 0.0
    %828 = vmatprep.subr.mxu0 0.0
    %829 = vmatpush1.msra.mxu0 0.0
    %830 = vmatprep.subr.mxu0 0.0
    %831 = vmatpush1.msra.mxu0 0.0
    %832 = vmatprep.subr.mxu0 0.0
    %833 = vmatpush1.msra.mxu0 0.0
    %834 = vmatprep.subr.mxu0 0.0
    %835 = vmatpush1.msra.mxu0 0.0
    %836 = vmatprep.subr.mxu0 0.0
    %837 = vmatpush1.msra.mxu0 0.0
    %838 = vmatprep.subr.mxu0 0.0
    %839 = vmatpush1.msra.mxu0 0.0
    %840 = vmatprep.mubr.f32.mxu0 0.0
    %841 = vmatmul.mubr.f32.gmra.mrb[0].mxu0 %v774
    %v842 = vpop.f32.mrb[0].mxu0
    %v843 = vadd.f32 0.0, %v842
    %v844 = vpop.f32.mrb[0].mxu0
    %v845 = vadd.f32 0.0, %v844
    %846 = vdwg.mxu0
    %v847 = vadd.f32 %v346, %v843
    %v848 = vadd.f32 %v348, %v845
    %v849 = vxor.u32 %v847, 2147483648
    %v850 = vxor.u32 %v848, 2147483648
    %v851 = vmul.f32 %v849, 1.442695
    %v852 = vpow.pop %v851
    %v853 = vmul.f32 %v850, 1.442695
    %v854 = vpow.pop %v853
    %v855 = vadd.f32 %v852, 1.0
    %v856 = vadd.f32 %v854, 1.0
    %v857 = vrcp.pop %v855
    %v858 = vmul.f32 1.0, %v857
    %v859 = vrcp.pop %v856
    %v860 = vmul.f32 1.0, %v859
    %v861 = vmul.f32 %v860, 2.0
    %v862 = vsub.f32 %v861, 1.0
    %v863 = vmul.f32 %v858, %v768
    %v864 = vmul.f32 %v858, %v862
    %866 = vrot.lane.b32.xlu0 %v864, 64
    %v867 = vpop.permute.xlu0 %866
    %v869 = vadd.f32 %v863, %v867
    %v870 = vtanh.pop %v869
    %v871 = vmul.f32 %v860, %v870
    %873 = vrot.lane.b32.xlu0 %v871, 64
    %v874 = vpop.permute.xlu0 %873
    %v875 = vsel %vm368, %v874, 0
    %877 = vmatprep.subr.mxu0 %v34
    %878 = vmatpush1.msra.mxu0 %v33
    %879 = vmatprep.subr.mxu0 %v36
    %880 = vmatpush1.msra.mxu0 %v35
    %881 = vmatprep.subr.mxu0 %v38
    %882 = vmatpush1.msra.mxu0 %v37
    %883 = vmatprep.subr.mxu0 %v40
    %884 = vmatpush1.msra.mxu0 %v39
    %885 = vmatprep.subr.mxu0 %v42
    %886 = vmatpush1.msra.mxu0 %v41
    %887 = vmatprep.subr.mxu0 %v44
    %888 = vmatpush1.msra.mxu0 %v43
    %889 = vmatprep.subr.mxu0 %v46
    %890 = vmatpush1.msra.mxu0 %v45
    %891 = vmatprep.subr.mxu0 %v48
    %892 = vmatpush1.msra.mxu0 %v47
    %893 = vmatprep.subr.mxu0 0.0
    %894 = vmatpush1.msra.mxu0 0.0
    %895 = vmatprep.subr.mxu0 0.0
    %896 = vmatpush1.msra.mxu0 0.0
    %897 = vmatprep.subr.mxu0 0.0
    %898 = vmatpush1.msra.mxu0 0.0
    %899 = vmatprep.subr.mxu0 0.0
    %900 = vmatpush1.msra.mxu0 0.0
    %901 = vmatprep.subr.mxu0 0.0
    %902 = vmatpush1.msra.mxu0 0.0
    %903 = vmatprep.subr.mxu0 0.0
    %904 = vmatpush1.msra.mxu0 0.0
    %905 = vmatprep.subr.mxu0 0.0
    %906 = vmatpush1.msra.mxu0 0.0
    %907 = vmatprep.subr.mxu0 0.0
    %908 = vmatpush1.msra.mxu0 0.0
    %909 = vmatprep.subr.mxu0 0.0
    %910 = vmatpush1.msra.mxu0 0.0
    %911 = vmatprep.subr.mxu0 0.0
    %912 = vmatpush1.msra.mxu0 0.0
    %913 = vmatprep.subr.mxu0 0.0
    %914 = vmatpush1.msra.mxu0 0.0
    %915 = vmatprep.subr.mxu0 0.0
    %916 = vmatpush1.msra.mxu0 0.0
    %917 = vmatprep.subr.mxu0 0.0
    %918 = vmatpush1.msra.mxu0 0.0
    %919 = vmatprep.subr.mxu0 0.0
    %920 = vmatpush1.msra.mxu0 0.0
    %921 = vmatprep.subr.mxu0 0.0
    %922 = vmatpush1.msra.mxu0 0.0
    %923 = vmatprep.subr.mxu0 0.0
    %924 = vmatpush1.msra.mxu0 0.0
    %925 = vmatprep.subr.mxu0 0.0
    %926 = vmatpush1.msra.mxu0 0.0
    %927 = vmatprep.subr.mxu0 0.0
    %928 = vmatpush1.msra.mxu0 0.0
    %929 = vmatprep.subr.mxu0 0.0
    %930 = vmatpush1.msra.mxu0 0.0
    %931 = vmatprep.subr.mxu0 0.0
    %932 = vmatpush1.msra.mxu0 0.0
    %933 = vmatprep.subr.mxu0 0.0
    %934 = vmatpush1.msra.mxu0 0.0
    %935 = vmatprep.subr.mxu0 0.0
    %936 = vmatpush1.msra.mxu0 0.0
    %937 = vmatprep.subr.mxu0 0.0
    %938 = vmatpush1.msra.mxu0 0.0
    %939 = vmatprep.subr.mxu0 0.0
    %940 = vmatpush1.msra.mxu0 0.0
    %941 = vmatprep.mubr.f32.mxu0 0.0
    %942 = vmatmul.mubr.f32.gmra.mrb[0].mxu0 %v875
    %v943 = vpop.f32.mrb[0].mxu0
    %v944 = vadd.f32 0.0, %v943
    %v945 = vpop.f32.mrb[0].mxu0
    %v946 = vadd.f32 0.0, %v945
    %947 = vdwg.mxu0
    %v948 = vadd.f32 %v352, %v944
    %v949 = vadd.f32 %v354, %v946
    %v950 = vxor.u32 %v948, 2147483648
    %v951 = vxor.u32 %v949, 2147483648
    %v952 = vmul.f32 %v950, 1.442695
    %v953 = vpow.pop %v952
    %v954 = vmul.f32 %v951, 1.442695
    %v955 = vpow.pop %v954
    %v956 = vadd.f32 %v953, 1.0
    %v957 = vadd.f32 %v955, 1.0
    %v958 = vrcp.pop %v956
    %v959 = vmul.f32 1.0, %v958
    %v960 = vrcp.pop %v957
    %v961 = vmul.f32 1.0, %v960
    %v962 = vmul.f32 %v961, 2.0
    %v963 = vsub.f32 %v962, 1.0
    %v964 = vmul.f32 %v959, %v869
    %v965 = vmul.f32 %v959, %v963
    %967 = vrot.lane.b32.xlu0 %v965, 64
    %v968 = vpop.permute.xlu0 %967
    %v970 = vadd.f32 %v964, %v968
    %v971 = vtanh.pop %v970
    %v972 = vmul.f32 %v961, %v971
    %974 = vrot.lane.b32.xlu0 %v972, 64
    %v975 = vpop.permute.xlu0 %974
    %v976 = vsel %vm368, %v975, 0
    %978 = vmatprep.subr.mxu0 %v34
    %979 = vmatpush1.msra.mxu0 %v33
    %980 = vmatprep.subr.mxu0 %v36
    %981 = vmatpush1.msra.mxu0 %v35
    %982 = vmatprep.subr.mxu0 %v38
    %983 = vmatpush1.msra.mxu0 %v37
    %984 = vmatprep.subr.mxu0 %v40
    %985 = vmatpush1.msra.mxu0 %v39
    %986 = vmatprep.subr.mxu0 %v42
    %987 = vmatpush1.msra.mxu0 %v41
    %988 = vmatprep.subr.mxu0 %v44
    %989 = vmatpush1.msra.mxu0 %v43
    %990 = vmatprep.subr.mxu0 %v46
    %991 = vmatpush1.msra.mxu0 %v45
    %992 = vmatprep.subr.mxu0 %v48
    %993 = vmatpush1.msra.mxu0 %v47
    %994 = vmatprep.subr.mxu0 0.0
    %995 = vmatpush1.msra.mxu0 0.0
    %996 = vmatprep.subr.mxu0 0.0
    %997 = vmatpush1.msra.mxu0 0.0
    %998 = vmatprep.subr.mxu0 0.0
    %999 = vmatpush1.msra.mxu0 0.0
    %1000 = vmatprep.subr.mxu0 0.0
    %1001 = vmatpush1.msra.mxu0 0.0
    %1002 = vmatprep.subr.mxu0 0.0
    %1003 = vmatpush1.msra.mxu0 0.0
    %1004 = vmatprep.subr.mxu0 0.0
    %1005 = vmatpush1.msra.mxu0 0.0
    %1006 = vmatprep.subr.mxu0 0.0
    %1007 = vmatpush1.msra.mxu0 0.0
    %1008 = vmatprep.subr.mxu0 0.0
    %1009 = vmatpush1.msra.mxu0 0.0
    %1010 = vmatprep.subr.mxu0 0.0
    %1011 = vmatpush1.msra.mxu0 0.0
    %1012 = vmatprep.subr.mxu0 0.0
    %1013 = vmatpush1.msra.mxu0 0.0
    %1014 = vmatprep.subr.mxu0 0.0
    %1015 = vmatpush1.msra.mxu0 0.0
    %1016 = vmatprep.subr.mxu0 0.0
    %1017 = vmatpush1.msra.mxu0 0.0
    %1018 = vmatprep.subr.mxu0 0.0
    %1019 = vmatpush1.msra.mxu0 0.0
    %1020 = vmatprep.subr.mxu0 0.0
    %1021 = vmatpush1.msra.mxu0 0.0
    %1022 = vmatprep.subr.mxu0 0.0
    %1023 = vmatpush1.msra.mxu0 0.0
    %1024 = vmatprep.subr.mxu0 0.0
    %1025 = vmatpush1.msra.mxu0 0.0
    %1026 = vmatprep.subr.mxu0 0.0
    %1027 = vmatpush1.msra.mxu0 0.0
    %1028 = vmatprep.subr.mxu0 0.0
    %1029 = vmatpush1.msra.mxu0 0.0
    %1030 = vmatprep.subr.mxu0 0.0
    %1031 = vmatpush1.msra.mxu0 0.0
    %1032 = vmatprep.subr.mxu0 0.0
    %1033 = vmatpush1.msra.mxu0 0.0
    %1034 = vmatprep.subr.mxu0 0.0
    %1035 = vmatpush1.msra.mxu0 0.0
    %1036 = vmatprep.subr.mxu0 0.0
    %1037 = vmatpush1.msra.mxu0 0.0
    %1038 = vmatprep.subr.mxu0 0.0
    %1039 = vmatpush1.msra.mxu0 0.0
    %1040 = vmatprep.subr.mxu0 0.0
    %1041 = vmatpush1.msra.mxu0 0.0
    %1042 = vmatprep.mubr.f32.mxu0 0.0
    %1043 = vmatmul.mubr.f32.gmra.mrb[0].mxu0 %v976
    %v1044 = vpop.f32.mrb[0].mxu0
    %v1045 = vadd.f32 0.0, %v1044
    %v1046 = vpop.f32.mrb[0].mxu0
    %v1047 = vadd.f32 0.0, %v1046
    %1048 = vdwg.mxu0
    %v1049 = vadd.f32 %v358, %v1045
    %v1050 = vadd.f32 %v360, %v1047
    %v1051 = vxor.u32 %v1049, 2147483648
    %v1052 = vxor.u32 %v1050, 2147483648
    %v1053 = vmul.f32 %v1051, 1.442695
    %v1054 = vpow.pop %v1053
    %v1055 = vmul.f32 %v1052, 1.442695
    %v1056 = vpow.pop %v1055
    %v1057 = vadd.f32 %v1054, 1.0
    %v1058 = vadd.f32 %v1056, 1.0
    %v1059 = vrcp.pop %v1057
    %v1060 = vmul.f32 1.0, %v1059
    %v1061 = vrcp.pop %v1058
    %v1062 = vmul.f32 1.0, %v1061
    %v1063 = vmul.f32 %v1062, 2.0
    %v1064 = vsub.f32 %v1063, 1.0
    %v1065 = vmul.f32 %v1060, %v970
    %v1066 = vmul.f32 %v1060, %v1064
    %1068 = vrot.lane.b32.xlu0 %v1066, 64
    %v1069 = vpop.permute.xlu0 %1068
    %v1071 = vadd.f32 %v1065, %v1069
    %v1072 = vtanh.pop %v1071
    %v1073 = vmul.f32 %v1062, %v1072
    %1075 = vrot.lane.b32.xlu0 %v1073, 64
    %v1076 = vpop.permute.xlu0 %1075
    %v1077 = vsel %vm368, %v1076, 0
    %1079 = vmatprep.subr.mxu0 %v34
    %1080 = vmatpush1.msra.mxu0 %v33
    %1081 = vmatprep.subr.mxu0 %v36
    %1082 = vmatpush1.msra.mxu0 %v35
    %1083 = vmatprep.subr.mxu0 %v38
    %1084 = vmatpush1.msra.mxu0 %v37
    %1085 = vmatprep.subr.mxu0 %v40
    %1086 = vmatpush1.msra.mxu0 %v39
    %1087 = vmatprep.subr.mxu0 %v42
    %1088 = vmatpush1.msra.mxu0 %v41
    %1089 = vmatprep.subr.mxu0 %v44
    %1090 = vmatpush1.msra.mxu0 %v43
    %1091 = vmatprep.subr.mxu0 %v46
    %1092 = vmatpush1.msra.mxu0 %v45
    %1093 = vmatprep.subr.mxu0 %v48
    %1094 = vmatpush1.msra.mxu0 %v47
    %1095 = vmatprep.subr.mxu0 0.0
    %1096 = vmatpush1.msra.mxu0 0.0
    %1097 = vmatprep.subr.mxu0 0.0
    %1098 = vmatpush1.msra.mxu0 0.0
    %1099 = vmatprep.subr.mxu0 0.0
    %1100 = vmatpush1.msra.mxu0 0.0
    %1101 = vmatprep.subr.mxu0 0.0
    %1102 = vmatpush1.msra.mxu0 0.0
    %1103 = vmatprep.subr.mxu0 0.0
    %1104 = vmatpush1.msra.mxu0 0.0
    %1105 = vmatprep.subr.mxu0 0.0
    %1106 = vmatpush1.msra.mxu0 0.0
    %1107 = vmatprep.subr.mxu0 0.0
    %1108 = vmatpush1.msra.mxu0 0.0
    %1109 = vmatprep.subr.mxu0 0.0
    %1110 = vmatpush1.msra.mxu0 0.0
    %1111 = vmatprep.subr.mxu0 0.0
    %1112 = vmatpush1.msra.mxu0 0.0
    %1113 = vmatprep.subr.mxu0 0.0
    %1114 = vmatpush1.msra.mxu0 0.0
    %1115 = vmatprep.subr.mxu0 0.0
    %1116 = vmatpush1.msra.mxu0 0.0
    %1117 = vmatprep.subr.mxu0 0.0
    %1118 = vmatpush1.msra.mxu0 0.0
    %1119 = vmatprep.subr.mxu0 0.0
    %1120 = vmatpush1.msra.mxu0 0.0
    %1121 = vmatprep.subr.mxu0 0.0
    %1122 = vmatpush1.msra.mxu0 0.0
    %1123 = vmatprep.subr.mxu0 0.0
    %1124 = vmatpush1.msra.mxu0 0.0
    %1125 = vmatprep.subr.mxu0 0.0
    %1126 = vmatpush1.msra.mxu0 0.0
    %1127 = vmatprep.subr.mxu0 0.0
    %1128 = vmatpush1.msra.mxu0 0.0
    %1129 = vmatprep.subr.mxu0 0.0
    %1130 = vmatpush1.msra.mxu0 0.0
    %1131 = vmatprep.subr.mxu0 0.0
    %1132 = vmatpush1.msra.mxu0 0.0
    %1133 = vmatprep.subr.mxu0 0.0
    %1134 = vmatpush1.msra.mxu0 0.0
    %1135 = vmatprep.subr.mxu0 0.0
    %1136 = vmatpush1.msra.mxu0 0.0
    %1137 = vmatprep.subr.mxu0 0.0
    %1138 = vmatpush1.msra.mxu0 0.0
    %1139 = vmatprep.subr.mxu0 0.0
    %1140 = vmatpush1.msra.mxu0 0.0
    %1141 = vmatprep.subr.mxu0 0.0
    %1142 = vmatpush1.msra.mxu0 0.0
    %1143 = vmatprep.mubr.f32.mxu0 0.0
    %1144 = vmatmul.mubr.f32.gmra.mrb[0].mxu0 %v1077
    %v1145 = vpop.f32.mrb[0].mxu0
    %v1146 = vadd.f32 0.0, %v1145
    %v1147 = vpop.f32.mrb[0].mxu0
    %v1148 = vadd.f32 0.0, %v1147
    %1149 = vdwg.mxu0
    %v1150 = vadd.f32 %v364, %v1146
    %v1151 = vadd.f32 %v366, %v1148
    %v1152 = vxor.u32 %v1150, 2147483648
    %v1153 = vxor.u32 %v1151, 2147483648
    %v1154 = vmul.f32 %v1152, 1.442695
    %v1155 = vpow.pop %v1154
    %v1156 = vmul.f32 %v1153, 1.442695
    %v1157 = vpow.pop %v1156
    %v1158 = vadd.f32 %v1155, 1.0
    %v1159 = vadd.f32 %v1157, 1.0
    %v1160 = vrcp.pop %v1158
    %v1161 = vmul.f32 1.0, %v1160
    %v1162 = vrcp.pop %v1159
    %v1163 = vmul.f32 1.0, %v1162
    %v1164 = vmul.f32 %v1163, 2.0
    %v1165 = vsub.f32 %v1164, 1.0
    %v1166 = vmul.f32 %v1161, %v1071
    %v1167 = vmul.f32 %v1161, %v1165
    %1169 = vrot.lane.b32.xlu0 %v1167, 64
    %v1170 = vpop.permute.xlu0 %1169
    %v1172 = vadd.f32 %v1166, %v1170
    %v1173 = vtanh.pop %v1172
    %v1174 = vmul.f32 %v1163, %v1173
    %v1176 = vlaneseq
    %v1177 = vshrl.u32 %v1176, 7
    %v1178 = vsub.s32 0, %v1177
    %v1179 = vrot.slane %v84, %v1178
    %v1180 = vlaneseq
    %v1181 = vshrl.u32 %v1180, 7
    %v1182 = vsub.s32 1, %v1181
    %v1183 = vrot.slane %v84, %v1182
    %1187 = vrot.lane.b32.xlu0 %v1174, 64
    %v1188 = vpop.permute.xlu0 %1187
    %v1189 = vsel %vm368, %v1188, 0
    %1191 = vmatprep.subr.mxu0 %v50
    %1192 = vmatpush1.msra.mxu0 %v49
    %1193 = vmatprep.subr.mxu0 %v52
    %1194 = vmatpush1.msra.mxu0 %v51
    %1195 = vmatprep.subr.mxu0 %v54
    %1196 = vmatpush1.msra.mxu0 %v53
    %1197 = vmatprep.subr.mxu0 %v56
    %1198 = vmatpush1.msra.mxu0 %v55
    %1199 = vmatprep.subr.mxu0 %v58
    %1200 = vmatpush1.msra.mxu0 %v57
    %1201 = vmatprep.subr.mxu0 %v60
    %1202 = vmatpush1.msra.mxu0 %v59
    %1203 = vmatprep.subr.mxu0 %v62
    %1204 = vmatpush1.msra.mxu0 %v61
    %1205 = vmatprep.subr.mxu0 %v64
    %1206 = vmatpush1.msra.mxu0 %v63
    %1207 = vmatprep.subr.mxu0 0.0
    %1208 = vmatpush1.msra.mxu0 0.0
    %1209 = vmatprep.subr.mxu0 0.0
    %1210 = vmatpush1.msra.mxu0 0.0
    %1211 = vmatprep.subr.mxu0 0.0
    %1212 = vmatpush1.msra.mxu0 0.0
    %1213 = vmatprep.subr.mxu0 0.0
    %1214 = vmatpush1.msra.mxu0 0.0
    %1215 = vmatprep.subr.mxu0 0.0
    %1216 = vmatpush1.msra.mxu0 0.0
    %1217 = vmatprep.subr.mxu0 0.0
    %1218 = vmatpush1.msra.mxu0 0.0
    %1219 = vmatprep.subr.mxu0 0.0
    %1220 = vmatpush1.msra.mxu0 0.0
    %1221 = vmatprep.subr.mxu0 0.0
    %1222 = vmatpush1.msra.mxu0 0.0
    %1223 = vmatprep.subr.mxu0 0.0
    %1224 = vmatpush1.msra.mxu0 0.0
    %1225 = vmatprep.subr.mxu0 0.0
    %1226 = vmatpush1.msra.mxu0 0.0
    %1227 = vmatprep.subr.mxu0 0.0
    %1228 = vmatpush1.msra.mxu0 0.0
    %1229 = vmatprep.subr.mxu0 0.0
    %1230 = vmatpush1.msra.mxu0 0.0
    %1231 = vmatprep.subr.mxu0 0.0
    %1232 = vmatpush1.msra.mxu0 0.0
    %1233 = vmatprep.subr.mxu0 0.0
    %1234 = vmatpush1.msra.mxu0 0.0
    %1235 = vmatprep.subr.mxu0 0.0
    %1236 = vmatpush1.msra.mxu0 0.0
    %1237 = vmatprep.subr.mxu0 0.0
    %1238 = vmatpush1.msra.mxu0 0.0
    %1239 = vmatprep.subr.mxu0 0.0
    %1240 = vmatpush1.msra.mxu0 0.0
    %1241 = vmatprep.subr.mxu0 0.0
    %1242 = vmatpush1.msra.mxu0 0.0
    %1243 = vmatprep.subr.mxu0 0.0
    %1244 = vmatpush1.msra.mxu0 0.0
    %1245 = vmatprep.subr.mxu0 0.0
    %1246 = vmatpush1.msra.mxu0 0.0
    %1247 = vmatprep.subr.mxu0 0.0
    %1248 = vmatpush1.msra.mxu0 0.0
    %1249 = vmatprep.subr.mxu0 0.0
    %1250 = vmatpush1.msra.mxu0 0.0
    %1251 = vmatprep.subr.mxu0 0.0
    %1252 = vmatpush1.msra.mxu0 0.0
    %1253 = vmatprep.subr.mxu0 0.0
    %1254 = vmatpush1.msra.mxu0 0.0
    %1255 = vmatprep.mubr.f32.mxu0 0.0
    %1256 = vmatmul.mubr.f32.gmra.mrb[0].mxu0 %v471
    %v1257 = vpop.f32.mrb[0].mxu0
    %v1258 = vadd.f32 %v1179, %v1257
    %v1259 = vpop.f32.mrb[0].mxu0
    %v1260 = vadd.f32 %v1183, %v1259
    %1261 = vmatprep.mubr.f32.mxu0 0.0
    %1262 = vmatmul.mubr.f32.gmra.mrb[0].mxu0 %v572
    %v1263 = vpop.f32.mrb[0].mxu0
    %v1264 = vadd.f32 %v1179, %v1263
    %v1265 = vpop.f32.mrb[0].mxu0
    %v1266 = vadd.f32 %v1183, %v1265
    %1267 = vmatprep.mubr.f32.mxu0 0.0
    %1268 = vmatmul.mubr.f32.gmra.mrb[0].mxu0 %v673
    %v1269 = vpop.f32.mrb[0].mxu0
    %v1270 = vadd.f32 %v1179, %v1269
    %v1271 = vpop.f32.mrb[0].mxu0
    %v1272 = vadd.f32 %v1183, %v1271
    %1273 = vmatprep.mubr.f32.mxu0 0.0
    %1274 = vmatmul.mubr.f32.gmra.mrb[0].mxu0 %v774
    %v1275 = vpop.f32.mrb[0].mxu0
    %v1276 = vadd.f32 %v1179, %v1275
    %v1277 = vpop.f32.mrb[0].mxu0
    %v1278 = vadd.f32 %v1183, %v1277
    %1279 = vmatprep.mubr.f32.mxu0 0.0
    %1280 = vmatmul.mubr.f32.gmra.mrb[0].mxu0 %v875
    %v1281 = vpop.f32.mrb[0].mxu0
    %v1282 = vadd.f32 %v1179, %v1281
    %v1283 = vpop.f32.mrb[0].mxu0
    %v1284 = vadd.f32 %v1183, %v1283
    %1285 = vmatprep.mubr.f32.mxu0 0.0
    %1286 = vmatmul.mubr.f32.gmra.mrb[0].mxu0 %v976
    %v1287 = vpop.f32.mrb[0].mxu0
    %v1288 = vadd.f32 %v1179, %v1287
    %v1289 = vpop.f32.mrb[0].mxu0
    %v1290 = vadd.f32 %v1183, %v1289
    %1291 = vmatprep.mubr.f32.mxu0 0.0
    %1292 = vmatmul.mubr.f32.gmra.mrb[0].mxu0 %v1077
    %v1293 = vpop.f32.mrb[0].mxu0
    %v1294 = vadd.f32 %v1179, %v1293
    %v1295 = vpop.f32.mrb[0].mxu0
    %v1296 = vadd.f32 %v1183, %v1295
    %1297 = vmatprep.mubr.f32.mxu0 0.0
    %1298 = vmatmul.mubr.f32.gmra.mrb[0].mxu0 %v1189
    %v1299 = vpop.f32.mrb[0].mxu0
    %v1300 = vadd.f32 %v1179, %v1299
    %v1301 = vpop.f32.mrb[0].mxu0
    %v1302 = vadd.f32 %v1183, %v1301
    %1303 = vdwg.mxu0
    %1304 = vmatprep.subr.mxu0 %v66
    %1305 = vmatpush1.msra.mxu0 %v65
    %1306 = vmatprep.subr.mxu0 %v68
    %1307 = vmatpush1.msra.mxu0 %v67
    %1308 = vmatprep.subr.mxu0 %v70
    %1309 = vmatpush1.msra.mxu0 %v69
    %1310 = vmatprep.subr.mxu0 %v72
    %1311 = vmatpush1.msra.mxu0 %v71
    %1312 = vmatprep.subr.mxu0 %v74
    %1313 = vmatpush1.msra.mxu0 %v73
    %1314 = vmatprep.subr.mxu0 %v76
    %1315 = vmatpush1.msra.mxu0 %v75
    %1316 = vmatprep.subr.mxu0 %v78
    %1317 = vmatpush1.msra.mxu0 %v77
    %1318 = vmatprep.subr.mxu0 %v80
    %1319 = vmatpush1.msra.mxu0 %v79
    %1320 = vmatprep.subr.mxu0 0.0
    %1321 = vmatpush1.msra.mxu0 0.0
    %1322 = vmatprep.subr.mxu0 0.0
    %1323 = vmatpush1.msra.mxu0 0.0
    %1324 = vmatprep.subr.mxu0 0.0
    %1325 = vmatpush1.msra.mxu0 0.0
    %1326 = vmatprep.subr.mxu0 0.0
    %1327 = vmatpush1.msra.mxu0 0.0
    %1328 = vmatprep.subr.mxu0 0.0
    %1329 = vmatpush1.msra.mxu0 0.0
    %1330 = vmatprep.subr.mxu0 0.0
    %1331 = vmatpush1.msra.mxu0 0.0
    %1332 = vmatprep.subr.mxu0 0.0
    %1333 = vmatpush1.msra.mxu0 0.0
    %1334 = vmatprep.subr.mxu0 0.0
    %1335 = vmatpush1.msra.mxu0 0.0
    %1336 = vmatprep.subr.mxu0 0.0
    %1337 = vmatpush1.msra.mxu0 0.0
    %1338 = vmatprep.subr.mxu0 0.0
    %1339 = vmatpush1.msra.mxu0 0.0
    %1340 = vmatprep.subr.mxu0 0.0
    %1341 = vmatpush1.msra.mxu0 0.0
    %1342 = vmatprep.subr.mxu0 0.0
    %1343 = vmatpush1.msra.mxu0 0.0
    %1344 = vmatprep.subr.mxu0 0.0
    %1345 = vmatpush1.msra.mxu0 0.0
    %1346 = vmatprep.subr.mxu0 0.0
    %1347 = vmatpush1.msra.mxu0 0.0
    %1348 = vmatprep.subr.mxu0 0.0
    %1349 = vmatpush1.msra.mxu0 0.0
    %1350 = vmatprep.subr.mxu0 0.0
    %1351 = vmatpush1.msra.mxu0 0.0
    %1352 = vmatprep.subr.mxu0 0.0
    %1353 = vmatpush1.msra.mxu0 0.0
    %1354 = vmatprep.subr.mxu0 0.0
    %1355 = vmatpush1.msra.mxu0 0.0
    %1356 = vmatprep.subr.mxu0 0.0
    %1357 = vmatpush1.msra.mxu0 0.0
    %1358 = vmatprep.subr.mxu0 0.0
    %1359 = vmatpush1.msra.mxu0 0.0
    %1360 = vmatprep.subr.mxu0 0.0
    %1361 = vmatpush1.msra.mxu0 0.0
    %1362 = vmatprep.subr.mxu0 0.0
    %1363 = vmatpush1.msra.mxu0 0.0
    %1364 = vmatprep.subr.mxu0 0.0
    %1365 = vmatpush1.msra.mxu0 0.0
    %1366 = vmatprep.subr.mxu0 0.0
    %1367 = vmatpush1.msra.mxu0 0.0
    %1368 = vmatprep.mubr.f32.mxu0 0.0
    %1369 = vmatmul.mubr.f32.gmra.mrb[0].mxu0 %v370
    %v1370 = vpop.f32.mrb[0].mxu0
    %v1371 = vadd.f32 0.0, %v1370
    %v1372 = vpop.f32.mrb[0].mxu0
    %v1373 = vadd.f32 0.0, %v1372
    %1374 = vdwg.mxu0
    %v1375 = vadd.f32 %v1258, %v1371
    %v1376 = vadd.f32 %v1260, %v1373
    %v1377 = vxor.u32 %v1375, 2147483648
    %v1378 = vxor.u32 %v1376, 2147483648
    %v1379 = vmul.f32 %v1377, 1.442695
    %v1380 = vpow.pop %v1379
    %v1381 = vmul.f32 %v1378, 1.442695
    %v1382 = vpow.pop %v1381
    %v1383 = vadd.f32 %v1380, 1.0
    %v1384 = vadd.f32 %v1382, 1.0
    %v1385 = vrcp.pop %v1383
    %v1386 = vmul.f32 1.0, %v1385
    %v1387 = vrcp.pop %v1384
    %v1388 = vmul.f32 1.0, %v1387
    %v1389 = vmul.f32 %v1388, 2.0
    %v1390 = vsub.f32 %v1389, 1.0
    %v1391 = vmul.f32 %v1386, 0.0
    %v1392 = vmul.f32 %v1386, %v1390
    %1394 = vrot.lane.b32.xlu0 %v1392, 64
    %v1395 = vpop.permute.xlu0 %1394
    %v1397 = vadd.f32 %v1391, %v1395
    %v1398 = vtanh.pop %v1397
    %v1399 = vmul.f32 %v1388, %v1398
    %1401 = vrot.lane.b32.xlu0 %v1399, 64
    %v1402 = vpop.permute.xlu0 %1401
    %v1403 = vsel %vm368, %v1402, 0
    %1405 = vmatprep.subr.mxu0 %v66
    %1406 = vmatpush1.msra.mxu0 %v65
    %1407 = vmatprep.subr.mxu0 %v68
    %1408 = vmatpush1.msra.mxu0 %v67
    %1409 = vmatprep.subr.mxu0 %v70
    %1410 = vmatpush1.msra.mxu0 %v69
    %1411 = vmatprep.subr.mxu0 %v72
    %1412 = vmatpush1.msra.mxu0 %v71
    %1413 = vmatprep.subr.mxu0 %v74
    %1414 = vmatpush1.msra.mxu0 %v73
    %1415 = vmatprep.subr.mxu0 %v76
    %1416 = vmatpush1.msra.mxu0 %v75
    %1417 = vmatprep.subr.mxu0 %v78
    %1418 = vmatpush1.msra.mxu0 %v77
    %1419 = vmatprep.subr.mxu0 %v80
    %1420 = vmatpush1.msra.mxu0 %v79
    %1421 = vmatprep.subr.mxu0 0.0
    %1422 = vmatpush1.msra.mxu0 0.0
    %1423 = vmatprep.subr.mxu0 0.0
    %1424 = vmatpush1.msra.mxu0 0.0
    %1425 = vmatprep.subr.mxu0 0.0
    %1426 = vmatpush1.msra.mxu0 0.0
    %1427 = vmatprep.subr.mxu0 0.0
    %1428 = vmatpush1.msra.mxu0 0.0
    %1429 = vmatprep.subr.mxu0 0.0
    %1430 = vmatpush1.msra.mxu0 0.0
    %1431 = vmatprep.subr.mxu0 0.0
    %1432 = vmatpush1.msra.mxu0 0.0
    %1433 = vmatprep.subr.mxu0 0.0
    %1434 = vmatpush1.msra.mxu0 0.0
    %1435 = vmatprep.subr.mxu0 0.0
    %1436 = vmatpush1.msra.mxu0 0.0
    %1437 = vmatprep.subr.mxu0 0.0
    %1438 = vmatpush1.msra.mxu0 0.0
    %1439 = vmatprep.subr.mxu0 0.0
    %1440 = vmatpush1.msra.mxu0 0.0
    %1441 = vmatprep.subr.mxu0 0.0
    %1442 = vmatpush1.msra.mxu0 0.0
    %1443 = vmatprep.subr.mxu0 0.0
    %1444 = vmatpush1.msra.mxu0 0.0
    %1445 = vmatprep.subr.mxu0 0.0
    %1446 = vmatpush1.msra.mxu0 0.0
    %1447 = vmatprep.subr.mxu0 0.0
    %1448 = vmatpush1.msra.mxu0 0.0
    %1449 = vmatprep.subr.mxu0 0.0
    %1450 = vmatpush1.msra.mxu0 0.0
    %1451 = vmatprep.subr.mxu0 0.0
    %1452 = vmatpush1.msra.mxu0 0.0
    %1453 = vmatprep.subr.mxu0 0.0
    %1454 = vmatpush1.msra.mxu0 0.0
    %1455 = vmatprep.subr.mxu0 0.0
    %1456 = vmatpush1.msra.mxu0 0.0
    %1457 = vmatprep.subr.mxu0 0.0
    %1458 = vmatpush1.msra.mxu0 0.0
    %1459 = vmatprep.subr.mxu0 0.0
    %1460 = vmatpush1.msra.mxu0 0.0
    %1461 = vmatprep.subr.mxu0 0.0
    %1462 = vmatpush1.msra.mxu0 0.0
    %1463 = vmatprep.subr.mxu0 0.0
    %1464 = vmatpush1.msra.mxu0 0.0
    %1465 = vmatprep.subr.mxu0 0.0
    %1466 = vmatpush1.msra.mxu0 0.0
    %1467 = vmatprep.subr.mxu0 0.0
    %1468 = vmatpush1.msra.mxu0 0.0
    %1469 = vmatprep.mubr.f32.mxu0 0.0
    %1470 = vmatmul.mubr.f32.gmra.mrb[0].mxu0 %v1403
    %v1471 = vpop.f32.mrb[0].mxu0
    %v1472 = vadd.f32 0.0, %v1471
    %v1473 = vpop.f32.mrb[0].mxu0
    %v1474 = vadd.f32 0.0, %v1473
    %1475 = vdwg.mxu0
    %v1476 = vadd.f32 %v1264, %v1472
    %v1477 = vadd.f32 %v1266, %v1474
    %v1478 = vxor.u32 %v1476, 2147483648
    %v1479 = vxor.u32 %v1477, 2147483648
    %v1480 = vmul.f32 %v1478, 1.442695
    %v1481 = vpow.pop %v1480
    %v1482 = vmul.f32 %v1479, 1.442695
    %v1483 = vpow.pop %v1482
    %v1484 = vadd.f32 %v1481, 1.0
    %v1485 = vadd.f32 %v1483, 1.0
    %v1486 = vrcp.pop %v1484
    %v1487 = vmul.f32 1.0, %v1486
    %v1488 = vrcp.pop %v1485
    %v1489 = vmul.f32 1.0, %v1488
    %v1490 = vmul.f32 %v1489, 2.0
    %v1491 = vsub.f32 %v1490, 1.0
    %v1492 = vmul.f32 %v1487, %v1397
    %v1493 = vmul.f32 %v1487, %v1491
    %1495 = vrot.lane.b32.xlu0 %v1493, 64
    %v1496 = vpop.permute.xlu0 %1495
    %v1498 = vadd.f32 %v1492, %v1496
    %v1499 = vtanh.pop %v1498
    %v1500 = vmul.f32 %v1489, %v1499
    %1502 = vrot.lane.b32.xlu0 %v1500, 64
    %v1503 = vpop.permute.xlu0 %1502
    %v1504 = vsel %vm368, %v1503, 0
    %1506 = vmatprep.subr.mxu0 %v66
    %1507 = vmatpush1.msra.mxu0 %v65
    %1508 = vmatprep.subr.mxu0 %v68
    %1509 = vmatpush1.msra.mxu0 %v67
    %1510 = vmatprep.subr.mxu0 %v70
    %1511 = vmatpush1.msra.mxu0 %v69
    %1512 = vmatprep.subr.mxu0 %v72
    %1513 = vmatpush1.msra.mxu0 %v71
    %1514 = vmatprep.subr.mxu0 %v74
    %1515 = vmatpush1.msra.mxu0 %v73
    %1516 = vmatprep.subr.mxu0 %v76
    %1517 = vmatpush1.msra.mxu0 %v75
    %1518 = vmatprep.subr.mxu0 %v78
    %1519 = vmatpush1.msra.mxu0 %v77
    %1520 = vmatprep.subr.mxu0 %v80
    %1521 = vmatpush1.msra.mxu0 %v79
    %1522 = vmatprep.subr.mxu0 0.0
    %1523 = vmatpush1.msra.mxu0 0.0
    %1524 = vmatprep.subr.mxu0 0.0
    %1525 = vmatpush1.msra.mxu0 0.0
    %1526 = vmatprep.subr.mxu0 0.0
    %1527 = vmatpush1.msra.mxu0 0.0
    %1528 = vmatprep.subr.mxu0 0.0
    %1529 = vmatpush1.msra.mxu0 0.0
    %1530 = vmatprep.subr.mxu0 0.0
    %1531 = vmatpush1.msra.mxu0 0.0
    %1532 = vmatprep.subr.mxu0 0.0
    %1533 = vmatpush1.msra.mxu0 0.0
    %1534 = vmatprep.subr.mxu0 0.0
    %1535 = vmatpush1.msra.mxu0 0.0
    %1536 = vmatprep.subr.mxu0 0.0
    %1537 = vmatpush1.msra.mxu0 0.0
    %1538 = vmatprep.subr.mxu0 0.0
    %1539 = vmatpush1.msra.mxu0 0.0
    %1540 = vmatprep.subr.mxu0 0.0
    %1541 = vmatpush1.msra.mxu0 0.0
    %1542 = vmatprep.subr.mxu0 0.0
    %1543 = vmatpush1.msra.mxu0 0.0
    %1544 = vmatprep.subr.mxu0 0.0
    %1545 = vmatpush1.msra.mxu0 0.0
    %1546 = vmatprep.subr.mxu0 0.0
    %1547 = vmatpush1.msra.mxu0 0.0
    %1548 = vmatprep.subr.mxu0 0.0
    %1549 = vmatpush1.msra.mxu0 0.0
    %1550 = vmatprep.subr.mxu0 0.0
    %1551 = vmatpush1.msra.mxu0 0.0
    %1552 = vmatprep.subr.mxu0 0.0
    %1553 = vmatpush1.msra.mxu0 0.0
    %1554 = vmatprep.subr.mxu0 0.0
    %1555 = vmatpush1.msra.mxu0 0.0
    %1556 = vmatprep.subr.mxu0 0.0
    %1557 = vmatpush1.msra.mxu0 0.0
    %1558 = vmatprep.subr.mxu0 0.0
    %1559 = vmatpush1.msra.mxu0 0.0
    %1560 = vmatprep.subr.mxu0 0.0
    %1561 = vmatpush1.msra.mxu0 0.0
    %1562 = vmatprep.subr.mxu0 0.0
    %1563 = vmatpush1.msra.mxu0 0.0
    %1564 = vmatprep.subr.mxu0 0.0
    %1565 = vmatpush1.msra.mxu0 0.0
    %1566 = vmatprep.subr.mxu0 0.0
    %1567 = vmatpush1.msra.mxu0 0.0
    %1568 = vmatprep.subr.mxu0 0.0
    %1569 = vmatpush1.msra.mxu0 0.0
    %1570 = vmatprep.mubr.f32.mxu0 0.0
    %1571 = vmatmul.mubr.f32.gmra.mrb[0].mxu0 %v1504
    %v1572 = vpop.f32.mrb[0].mxu0
    %v1573 = vadd.f32 0.0, %v1572
    %v1574 = vpop.f32.mrb[0].mxu0
    %v1575 = vadd.f32 0.0, %v1574
    %1576 = vdwg.mxu0
    %v1577 = vadd.f32 %v1270, %v1573
    %v1578 = vadd.f32 %v1272, %v1575
    %v1579 = vxor.u32 %v1577, 2147483648
    %v1580 = vxor.u32 %v1578, 2147483648
    %v1581 = vmul.f32 %v1579, 1.442695
    %v1582 = vpow.pop %v1581
    %v1583 = vmul.f32 %v1580, 1.442695
    %v1584 = vpow.pop %v1583
    %v1585 = vadd.f32 %v1582, 1.0
    %v1586 = vadd.f32 %v1584, 1.0
    %v1587 = vrcp.pop %v1585
    %v1588 = vmul.f32 1.0, %v1587
    %v1589 = vrcp.pop %v1586
    %v1590 = vmul.f32 1.0, %v1589
    %v1591 = vmul.f32 %v1590, 2.0
    %v1592 = vsub.f32 %v1591, 1.0
    %v1593 = vmul.f32 %v1588, %v1498
    %v1594 = vmul.f32 %v1588, %v1592
    %1596 = vrot.lane.b32.xlu0 %v1594, 64
    %v1597 = vpop.permute.xlu0 %1596
    %v1599 = vadd.f32 %v1593, %v1597
    %v1600 = vtanh.pop %v1599
    %v1601 = vmul.f32 %v1590, %v1600
    %1603 = vrot.lane.b32.xlu0 %v1601, 64
    %v1604 = vpop.permute.xlu0 %1603
    %v1605 = vsel %vm368, %v1604, 0
    %1607 = vmatprep.subr.mxu0 %v66
    %1608 = vmatpush1.msra.mxu0 %v65
    %1609 = vmatprep.subr.mxu0 %v68
    %1610 = vmatpush1.msra.mxu0 %v67
    %1611 = vmatprep.subr.mxu0 %v70
    %1612 = vmatpush1.msra.mxu0 %v69
    %1613 = vmatprep.subr.mxu0 %v72
    %1614 = vmatpush1.msra.mxu0 %v71
    %1615 = vmatprep.subr.mxu0 %v74
    %1616 = vmatpush1.msra.mxu0 %v73
    %1617 = vmatprep.subr.mxu0 %v76
    %1618 = vmatpush1.msra.mxu0 %v75
    %1619 = vmatprep.subr.mxu0 %v78
    %1620 = vmatpush1.msra.mxu0 %v77
    %1621 = vmatprep.subr.mxu0 %v80
    %1622 = vmatpush1.msra.mxu0 %v79
    %1623 = vmatprep.subr.mxu0 0.0
    %1624 = vmatpush1.msra.mxu0 0.0
    %1625 = vmatprep.subr.mxu0 0.0
    %1626 = vmatpush1.msra.mxu0 0.0
    %1627 = vmatprep.subr.mxu0 0.0
    %1628 = vmatpush1.msra.mxu0 0.0
    %1629 = vmatprep.subr.mxu0 0.0
    %1630 = vmatpush1.msra.mxu0 0.0
    %1631 = vmatprep.subr.mxu0 0.0
    %1632 = vmatpush1.msra.mxu0 0.0
    %1633 = vmatprep.subr.mxu0 0.0
    %1634 = vmatpush1.msra.mxu0 0.0
    %1635 = vmatprep.subr.mxu0 0.0
    %1636 = vmatpush1.msra.mxu0 0.0
    %1637 = vmatprep.subr.mxu0 0.0
    %1638 = vmatpush1.msra.mxu0 0.0
    %1639 = vmatprep.subr.mxu0 0.0
    %1640 = vmatpush1.msra.mxu0 0.0
    %1641 = vmatprep.subr.mxu0 0.0
    %1642 = vmatpush1.msra.mxu0 0.0
    %1643 = vmatprep.subr.mxu0 0.0
    %1644 = vmatpush1.msra.mxu0 0.0
    %1645 = vmatprep.subr.mxu0 0.0
    %1646 = vmatpush1.msra.mxu0 0.0
    %1647 = vmatprep.subr.mxu0 0.0
    %1648 = vmatpush1.msra.mxu0 0.0
    %1649 = vmatprep.subr.mxu0 0.0
    %1650 = vmatpush1.msra.mxu0 0.0
    %1651 = vmatprep.subr.mxu0 0.0
    %1652 = vmatpush1.msra.mxu0 0.0
    %1653 = vmatprep.subr.mxu0 0.0
    %1654 = vmatpush1.msra.mxu0 0.0
    %1655 = vmatprep.subr.mxu0 0.0
    %1656 = vmatpush1.msra.mxu0 0.0
    %1657 = vmatprep.subr.mxu0 0.0
    %1658 = vmatpush1.msra.mxu0 0.0
    %1659 = vmatprep.subr.mxu0 0.0
    %1660 = vmatpush1.msra.mxu0 0.0
    %1661 = vmatprep.subr.mxu0 0.0
    %1662 = vmatpush1.msra.mxu0 0.0
    %1663 = vmatprep.subr.mxu0 0.0
    %1664 = vmatpush1.msra.mxu0 0.0
    %1665 = vmatprep.subr.mxu0 0.0
    %1666 = vmatpush1.msra.mxu0 0.0
    %1667 = vmatprep.subr.mxu0 0.0
    %1668 = vmatpush1.msra.mxu0 0.0
    %1669 = vmatprep.subr.mxu0 0.0
    %1670 = vmatpush1.msra.mxu0 0.0
    %1671 = vmatprep.mubr.f32.mxu0 0.0
    %1672 = vmatmul.mubr.f32.gmra.mrb[0].mxu0 %v1605
    %v1673 = vpop.f32.mrb[0].mxu0
    %v1674 = vadd.f32 0.0, %v1673
    %v1675 = vpop.f32.mrb[0].mxu0
    %v1676 = vadd.f32 0.0, %v1675
    %1677 = vdwg.mxu0
    %v1678 = vadd.f32 %v1276, %v1674
    %v1679 = vadd.f32 %v1278, %v1676
    %v1680 = vxor.u32 %v1678, 2147483648
    %v1681 = vxor.u32 %v1679, 2147483648
    %v1682 = vmul.f32 %v1680, 1.442695
    %v1683 = vpow.pop %v1682
    %v1684 = vmul.f32 %v1681, 1.442695
    %v1685 = vpow.pop %v1684
    %v1686 = vadd.f32 %v1683, 1.0
    %v1687 = vadd.f32 %v1685, 1.0
    %v1688 = vrcp.pop %v1686
    %v1689 = vmul.f32 1.0, %v1688
    %v1690 = vrcp.pop %v1687
    %v1691 = vmul.f32 1.0, %v1690
    %v1692 = vmul.f32 %v1691, 2.0
    %v1693 = vsub.f32 %v1692, 1.0
    %v1694 = vmul.f32 %v1689, %v1599
    %v1695 = vmul.f32 %v1689, %v1693
    %1697 = vrot.lane.b32.xlu0 %v1695, 64
    %v1698 = vpop.permute.xlu0 %1697
    %v1700 = vadd.f32 %v1694, %v1698
    %v1701 = vtanh.pop %v1700
    %v1702 = vmul.f32 %v1691, %v1701
    %1704 = vrot.lane.b32.xlu0 %v1702, 64
    %v1705 = vpop.permute.xlu0 %1704
    %v1706 = vsel %vm368, %v1705, 0
    %1708 = vmatprep.subr.mxu0 %v66
    %1709 = vmatpush1.msra.mxu0 %v65
    %1710 = vmatprep.subr.mxu0 %v68
    %1711 = vmatpush1.msra.mxu0 %v67
    %1712 = vmatprep.subr.mxu0 %v70
    %1713 = vmatpush1.msra.mxu0 %v69
    %1714 = vmatprep.subr.mxu0 %v72
    %1715 = vmatpush1.msra.mxu0 %v71
    %1716 = vmatprep.subr.mxu0 %v74
    %1717 = vmatpush1.msra.mxu0 %v73
    %1718 = vmatprep.subr.mxu0 %v76
    %1719 = vmatpush1.msra.mxu0 %v75
    %1720 = vmatprep.subr.mxu0 %v78
    %1721 = vmatpush1.msra.mxu0 %v77
    %1722 = vmatprep.subr.mxu0 %v80
    %1723 = vmatpush1.msra.mxu0 %v79
    %1724 = vmatprep.subr.mxu0 0.0
    %1725 = vmatpush1.msra.mxu0 0.0
    %1726 = vmatprep.subr.mxu0 0.0
    %1727 = vmatpush1.msra.mxu0 0.0
    %1728 = vmatprep.subr.mxu0 0.0
    %1729 = vmatpush1.msra.mxu0 0.0
    %1730 = vmatprep.subr.mxu0 0.0
    %1731 = vmatpush1.msra.mxu0 0.0
    %1732 = vmatprep.subr.mxu0 0.0
    %1733 = vmatpush1.msra.mxu0 0.0
    %1734 = vmatprep.subr.mxu0 0.0
    %1735 = vmatpush1.msra.mxu0 0.0
    %1736 = vmatprep.subr.mxu0 0.0
    %1737 = vmatpush1.msra.mxu0 0.0
    %1738 = vmatprep.subr.mxu0 0.0
    %1739 = vmatpush1.msra.mxu0 0.0
    %1740 = vmatprep.subr.mxu0 0.0
    %1741 = vmatpush1.msra.mxu0 0.0
    %1742 = vmatprep.subr.mxu0 0.0
    %1743 = vmatpush1.msra.mxu0 0.0
    %1744 = vmatprep.subr.mxu0 0.0
    %1745 = vmatpush1.msra.mxu0 0.0
    %1746 = vmatprep.subr.mxu0 0.0
    %1747 = vmatpush1.msra.mxu0 0.0
    %1748 = vmatprep.subr.mxu0 0.0
    %1749 = vmatpush1.msra.mxu0 0.0
    %1750 = vmatprep.subr.mxu0 0.0
    %1751 = vmatpush1.msra.mxu0 0.0
    %1752 = vmatprep.subr.mxu0 0.0
    %1753 = vmatpush1.msra.mxu0 0.0
    %1754 = vmatprep.subr.mxu0 0.0
    %1755 = vmatpush1.msra.mxu0 0.0
    %1756 = vmatprep.subr.mxu0 0.0
    %1757 = vmatpush1.msra.mxu0 0.0
    %1758 = vmatprep.subr.mxu0 0.0
    %1759 = vmatpush1.msra.mxu0 0.0
    %1760 = vmatprep.subr.mxu0 0.0
    %1761 = vmatpush1.msra.mxu0 0.0
    %1762 = vmatprep.subr.mxu0 0.0
    %1763 = vmatpush1.msra.mxu0 0.0
    %1764 = vmatprep.subr.mxu0 0.0
    %1765 = vmatpush1.msra.mxu0 0.0
    %1766 = vmatprep.subr.mxu0 0.0
    %1767 = vmatpush1.msra.mxu0 0.0
    %1768 = vmatprep.subr.mxu0 0.0
    %1769 = vmatpush1.msra.mxu0 0.0
    %1770 = vmatprep.subr.mxu0 0.0
    %1771 = vmatpush1.msra.mxu0 0.0
    %1772 = vmatprep.mubr.f32.mxu0 0.0
    %1773 = vmatmul.mubr.f32.gmra.mrb[0].mxu0 %v1706
    %v1774 = vpop.f32.mrb[0].mxu0
    %v1775 = vadd.f32 0.0, %v1774
    %v1776 = vpop.f32.mrb[0].mxu0
    %v1777 = vadd.f32 0.0, %v1776
    %1778 = vdwg.mxu0
    %v1779 = vadd.f32 %v1282, %v1775
    %v1780 = vadd.f32 %v1284, %v1777
    %v1781 = vxor.u32 %v1779, 2147483648
    %v1782 = vxor.u32 %v1780, 2147483648
    %v1783 = vmul.f32 %v1781, 1.442695
    %v1784 = vpow.pop %v1783
    %v1785 = vmul.f32 %v1782, 1.442695
    %v1786 = vpow.pop %v1785
    %v1787 = vadd.f32 %v1784, 1.0
    %v1788 = vadd.f32 %v1786, 1.0
    %v1789 = vrcp.pop %v1787
    %v1790 = vmul.f32 1.0, %v1789
    %v1791 = vrcp.pop %v1788
    %v1792 = vmul.f32 1.0, %v1791
    %v1793 = vmul.f32 %v1792, 2.0
    %v1794 = vsub.f32 %v1793, 1.0
    %v1795 = vmul.f32 %v1790, %v1700
    %v1796 = vmul.f32 %v1790, %v1794
    %1798 = vrot.lane.b32.xlu0 %v1796, 64
    %v1799 = vpop.permute.xlu0 %1798
    %v1801 = vadd.f32 %v1795, %v1799
    %v1802 = vtanh.pop %v1801
    %v1803 = vmul.f32 %v1792, %v1802
    %1805 = vrot.lane.b32.xlu0 %v1803, 64
    %v1806 = vpop.permute.xlu0 %1805
    %v1807 = vsel %vm368, %v1806, 0
    %1809 = vmatprep.subr.mxu0 %v66
    %1810 = vmatpush1.msra.mxu0 %v65
    %1811 = vmatprep.subr.mxu0 %v68
    %1812 = vmatpush1.msra.mxu0 %v67
    %1813 = vmatprep.subr.mxu0 %v70
    %1814 = vmatpush1.msra.mxu0 %v69
    %1815 = vmatprep.subr.mxu0 %v72
    %1816 = vmatpush1.msra.mxu0 %v71
    %1817 = vmatprep.subr.mxu0 %v74
    %1818 = vmatpush1.msra.mxu0 %v73
    %1819 = vmatprep.subr.mxu0 %v76
    %1820 = vmatpush1.msra.mxu0 %v75
    %1821 = vmatprep.subr.mxu0 %v78
    %1822 = vmatpush1.msra.mxu0 %v77
    %1823 = vmatprep.subr.mxu0 %v80
    %1824 = vmatpush1.msra.mxu0 %v79
    %1825 = vmatprep.subr.mxu0 0.0
    %1826 = vmatpush1.msra.mxu0 0.0
    %1827 = vmatprep.subr.mxu0 0.0
    %1828 = vmatpush1.msra.mxu0 0.0
    %1829 = vmatprep.subr.mxu0 0.0
    %1830 = vmatpush1.msra.mxu0 0.0
    %1831 = vmatprep.subr.mxu0 0.0
    %1832 = vmatpush1.msra.mxu0 0.0
    %1833 = vmatprep.subr.mxu0 0.0
    %1834 = vmatpush1.msra.mxu0 0.0
    %1835 = vmatprep.subr.mxu0 0.0
    %1836 = vmatpush1.msra.mxu0 0.0
    %1837 = vmatprep.subr.mxu0 0.0
    %1838 = vmatpush1.msra.mxu0 0.0
    %1839 = vmatprep.subr.mxu0 0.0
    %1840 = vmatpush1.msra.mxu0 0.0
    %1841 = vmatprep.subr.mxu0 0.0
    %1842 = vmatpush1.msra.mxu0 0.0
    %1843 = vmatprep.subr.mxu0 0.0
    %1844 = vmatpush1.msra.mxu0 0.0
    %1845 = vmatprep.subr.mxu0 0.0
    %1846 = vmatpush1.msra.mxu0 0.0
    %1847 = vmatprep.subr.mxu0 0.0
    %1848 = vmatpush1.msra.mxu0 0.0
    %1849 = vmatprep.subr.mxu0 0.0
    %1850 = vmatpush1.msra.mxu0 0.0
    %1851 = vmatprep.subr.mxu0 0.0
    %1852 = vmatpush1.msra.mxu0 0.0
    %1853 = vmatprep.subr.mxu0 0.0
    %1854 = vmatpush1.msra.mxu0 0.0
    %1855 = vmatprep.subr.mxu0 0.0
    %1856 = vmatpush1.msra.mxu0 0.0
    %1857 = vmatprep.subr.mxu0 0.0
    %1858 = vmatpush1.msra.mxu0 0.0
    %1859 = vmatprep.subr.mxu0 0.0
    %1860 = vmatpush1.msra.mxu0 0.0
    %1861 = vmatprep.subr.mxu0 0.0
    %1862 = vmatpush1.msra.mxu0 0.0
    %1863 = vmatprep.subr.mxu0 0.0
    %1864 = vmatpush1.msra.mxu0 0.0
    %1865 = vmatprep.subr.mxu0 0.0
    %1866 = vmatpush1.msra.mxu0 0.0
    %1867 = vmatprep.subr.mxu0 0.0
    %1868 = vmatpush1.msra.mxu0 0.0
    %1869 = vmatprep.subr.mxu0 0.0
    %1870 = vmatpush1.msra.mxu0 0.0
    %1871 = vmatprep.subr.mxu0 0.0
    %1872 = vmatpush1.msra.mxu0 0.0
    %1873 = vmatprep.mubr.f32.mxu0 0.0
    %1874 = vmatmul.mubr.f32.gmra.mrb[0].mxu0 %v1807
    %v1875 = vpop.f32.mrb[0].mxu0
    %v1876 = vadd.f32 0.0, %v1875
    %v1877 = vpop.f32.mrb[0].mxu0
    %v1878 = vadd.f32 0.0, %v1877
    %1879 = vdwg.mxu0
    %v1880 = vadd.f32 %v1288, %v1876
    %v1881 = vadd.f32 %v1290, %v1878
    %v1882 = vxor.u32 %v1880, 2147483648
    %v1883 = vxor.u32 %v1881, 2147483648
    %v1884 = vmul.f32 %v1882, 1.442695
    %v1885 = vpow.pop %v1884
    %v1886 = vmul.f32 %v1883, 1.442695
    %v1887 = vpow.pop %v1886
    %v1888 = vadd.f32 %v1885, 1.0
    %v1889 = vadd.f32 %v1887, 1.0
    %v1890 = vrcp.pop %v1888
    %v1891 = vmul.f32 1.0, %v1890
    %v1892 = vrcp.pop %v1889
    %v1893 = vmul.f32 1.0, %v1892
    %v1894 = vmul.f32 %v1893, 2.0
    %v1895 = vsub.f32 %v1894, 1.0
    %v1896 = vmul.f32 %v1891, %v1801
    %v1897 = vmul.f32 %v1891, %v1895
    %1899 = vrot.lane.b32.xlu0 %v1897, 64
    %v1900 = vpop.permute.xlu0 %1899
    %v1902 = vadd.f32 %v1896, %v1900
    %v1903 = vtanh.pop %v1902
    %v1904 = vmul.f32 %v1893, %v1903
    %1906 = vrot.lane.b32.xlu0 %v1904, 64
    %v1907 = vpop.permute.xlu0 %1906
    %v1908 = vsel %vm368, %v1907, 0
    %1910 = vmatprep.subr.mxu0 %v66
    %1911 = vmatpush1.msra.mxu0 %v65
    %1912 = vmatprep.subr.mxu0 %v68
    %1913 = vmatpush1.msra.mxu0 %v67
    %1914 = vmatprep.subr.mxu0 %v70
    %1915 = vmatpush1.msra.mxu0 %v69
    %1916 = vmatprep.subr.mxu0 %v72
    %1917 = vmatpush1.msra.mxu0 %v71
    %1918 = vmatprep.subr.mxu0 %v74
    %1919 = vmatpush1.msra.mxu0 %v73
    %1920 = vmatprep.subr.mxu0 %v76
    %1921 = vmatpush1.msra.mxu0 %v75
    %1922 = vmatprep.subr.mxu0 %v78
    %1923 = vmatpush1.msra.mxu0 %v77
    %1924 = vmatprep.subr.mxu0 %v80
    %1925 = vmatpush1.msra.mxu0 %v79
    %1926 = vmatprep.subr.mxu0 0.0
    %1927 = vmatpush1.msra.mxu0 0.0
    %1928 = vmatprep.subr.mxu0 0.0
    %1929 = vmatpush1.msra.mxu0 0.0
    %1930 = vmatprep.subr.mxu0 0.0
    %1931 = vmatpush1.msra.mxu0 0.0
    %1932 = vmatprep.subr.mxu0 0.0
    %1933 = vmatpush1.msra.mxu0 0.0
    %1934 = vmatprep.subr.mxu0 0.0
    %1935 = vmatpush1.msra.mxu0 0.0
    %1936 = vmatprep.subr.mxu0 0.0
    %1937 = vmatpush1.msra.mxu0 0.0
    %1938 = vmatprep.subr.mxu0 0.0
    %1939 = vmatpush1.msra.mxu0 0.0
    %1940 = vmatprep.subr.mxu0 0.0
    %1941 = vmatpush1.msra.mxu0 0.0
    %1942 = vmatprep.subr.mxu0 0.0
    %1943 = vmatpush1.msra.mxu0 0.0
    %1944 = vmatprep.subr.mxu0 0.0
    %1945 = vmatpush1.msra.mxu0 0.0
    %1946 = vmatprep.subr.mxu0 0.0
    %1947 = vmatpush1.msra.mxu0 0.0
    %1948 = vmatprep.subr.mxu0 0.0
    %1949 = vmatpush1.msra.mxu0 0.0
    %1950 = vmatprep.subr.mxu0 0.0
    %1951 = vmatpush1.msra.mxu0 0.0
    %1952 = vmatprep.subr.mxu0 0.0
    %1953 = vmatpush1.msra.mxu0 0.0
    %1954 = vmatprep.subr.mxu0 0.0
    %1955 = vmatpush1.msra.mxu0 0.0
    %1956 = vmatprep.subr.mxu0 0.0
    %1957 = vmatpush1.msra.mxu0 0.0
    %1958 = vmatprep.subr.mxu0 0.0
    %1959 = vmatpush1.msra.mxu0 0.0
    %1960 = vmatprep.subr.mxu0 0.0
    %1961 = vmatpush1.msra.mxu0 0.0
    %1962 = vmatprep.subr.mxu0 0.0
    %1963 = vmatpush1.msra.mxu0 0.0
    %1964 = vmatprep.subr.mxu0 0.0
    %1965 = vmatpush1.msra.mxu0 0.0
    %1966 = vmatprep.subr.mxu0 0.0
    %1967 = vmatpush1.msra.mxu0 0.0
    %1968 = vmatprep.subr.mxu0 0.0
    %1969 = vmatpush1.msra.mxu0 0.0
    %1970 = vmatprep.subr.mxu0 0.0
    %1971 = vmatpush1.msra.mxu0 0.0
    %1972 = vmatprep.subr.mxu0 0.0
    %1973 = vmatpush1.msra.mxu0 0.0
    %1974 = vmatprep.mubr.f32.mxu0 0.0
    %1975 = vmatmul.mubr.f32.gmra.mrb[0].mxu0 %v1908
    %v1976 = vpop.f32.mrb[0].mxu0
    %v1977 = vadd.f32 0.0, %v1976
    %v1978 = vpop.f32.mrb[0].mxu0
    %v1979 = vadd.f32 0.0, %v1978
    %1980 = vdwg.mxu0
    %v1981 = vadd.f32 %v1294, %v1977
    %v1982 = vadd.f32 %v1296, %v1979
    %v1983 = vxor.u32 %v1981, 2147483648
    %v1984 = vxor.u32 %v1982, 2147483648
    %v1985 = vmul.f32 %v1983, 1.442695
    %v1986 = vpow.pop %v1985
    %v1987 = vmul.f32 %v1984, 1.442695
    %v1988 = vpow.pop %v1987
    %v1989 = vadd.f32 %v1986, 1.0
    %v1990 = vadd.f32 %v1988, 1.0
    %v1991 = vrcp.pop %v1989
    %v1992 = vmul.f32 1.0, %v1991
    %v1993 = vrcp.pop %v1990
    %v1994 = vmul.f32 1.0, %v1993
    %v1995 = vmul.f32 %v1994, 2.0
    %v1996 = vsub.f32 %v1995, 1.0
    %v1997 = vmul.f32 %v1992, %v1902
    %v1998 = vmul.f32 %v1992, %v1996
    %2000 = vrot.lane.b32.xlu0 %v1998, 64
    %v2001 = vpop.permute.xlu0 %2000
    %v2003 = vadd.f32 %v1997, %v2001
    %v2004 = vtanh.pop %v2003
    %v2005 = vmul.f32 %v1994, %v2004
    %2007 = vrot.lane.b32.xlu0 %v2005, 64
    %v2008 = vpop.permute.xlu0 %2007
    %v2009 = vsel %vm368, %v2008, 0
    %2011 = vmatprep.subr.mxu0 %v66
    %2012 = vmatpush1.msra.mxu0 %v65
    %2013 = vmatprep.subr.mxu0 %v68
    %2014 = vmatpush1.msra.mxu0 %v67
    %2015 = vmatprep.subr.mxu0 %v70
    %2016 = vmatpush1.msra.mxu0 %v69
    %2017 = vmatprep.subr.mxu0 %v72
    %2018 = vmatpush1.msra.mxu0 %v71
    %2019 = vmatprep.subr.mxu0 %v74
    %2020 = vmatpush1.msra.mxu0 %v73
    %2021 = vmatprep.subr.mxu0 %v76
    %2022 = vmatpush1.msra.mxu0 %v75
    %2023 = vmatprep.subr.mxu0 %v78
    %2024 = vmatpush1.msra.mxu0 %v77
    %2025 = vmatprep.subr.mxu0 %v80
    %2026 = vmatpush1.msra.mxu0 %v79
    %2027 = vmatprep.subr.mxu0 0.0
    %2028 = vmatpush1.msra.mxu0 0.0
    %2029 = vmatprep.subr.mxu0 0.0
    %2030 = vmatpush1.msra.mxu0 0.0
    %2031 = vmatprep.subr.mxu0 0.0
    %2032 = vmatpush1.msra.mxu0 0.0
    %2033 = vmatprep.subr.mxu0 0.0
    %2034 = vmatpush1.msra.mxu0 0.0
    %2035 = vmatprep.subr.mxu0 0.0
    %2036 = vmatpush1.msra.mxu0 0.0
    %2037 = vmatprep.subr.mxu0 0.0
    %2038 = vmatpush1.msra.mxu0 0.0
    %2039 = vmatprep.subr.mxu0 0.0
    %2040 = vmatpush1.msra.mxu0 0.0
    %2041 = vmatprep.subr.mxu0 0.0
    %2042 = vmatpush1.msra.mxu0 0.0
    %2043 = vmatprep.subr.mxu0 0.0
    %2044 = vmatpush1.msra.mxu0 0.0
    %2045 = vmatprep.subr.mxu0 0.0
    %2046 = vmatpush1.msra.mxu0 0.0
    %2047 = vmatprep.subr.mxu0 0.0
    %2048 = vmatpush1.msra.mxu0 0.0
    %2049 = vmatprep.subr.mxu0 0.0
    %2050 = vmatpush1.msra.mxu0 0.0
    %2051 = vmatprep.subr.mxu0 0.0
    %2052 = vmatpush1.msra.mxu0 0.0
    %2053 = vmatprep.subr.mxu0 0.0
    %2054 = vmatpush1.msra.mxu0 0.0
    %2055 = vmatprep.subr.mxu0 0.0
    %2056 = vmatpush1.msra.mxu0 0.0
    %2057 = vmatprep.subr.mxu0 0.0
    %2058 = vmatpush1.msra.mxu0 0.0
    %2059 = vmatprep.subr.mxu0 0.0
    %2060 = vmatpush1.msra.mxu0 0.0
    %2061 = vmatprep.subr.mxu0 0.0
    %2062 = vmatpush1.msra.mxu0 0.0
    %2063 = vmatprep.subr.mxu0 0.0
    %2064 = vmatpush1.msra.mxu0 0.0
    %2065 = vmatprep.subr.mxu0 0.0
    %2066 = vmatpush1.msra.mxu0 0.0
    %2067 = vmatprep.subr.mxu0 0.0
    %2068 = vmatpush1.msra.mxu0 0.0
    %2069 = vmatprep.subr.mxu0 0.0
    %2070 = vmatpush1.msra.mxu0 0.0
    %2071 = vmatprep.subr.mxu0 0.0
    %2072 = vmatpush1.msra.mxu0 0.0
    %2073 = vmatprep.subr.mxu0 0.0
    %2074 = vmatpush1.msra.mxu0 0.0
    %2075 = vmatprep.mubr.f32.mxu0 0.0
    %2076 = vmatmul.mubr.f32.gmra.mrb[0].mxu0 %v2009
    %v2077 = vpop.f32.mrb[0].mxu0
    %v2078 = vadd.f32 0.0, %v2077
    %v2079 = vpop.f32.mrb[0].mxu0
    %v2080 = vadd.f32 0.0, %v2079
    %2081 = vdwg.mxu0
    %v2082 = vadd.f32 %v1300, %v2078
    %v2083 = vadd.f32 %v1302, %v2080
    %v2084 = vxor.u32 %v2082, 2147483648
    %v2085 = vxor.u32 %v2083, 2147483648
    %v2086 = vmul.f32 %v2084, 1.442695
    %v2087 = vpow.pop %v2086
    %v2088 = vmul.f32 %v2085, 1.442695
    %v2089 = vpow.pop %v2088
    %v2090 = vadd.f32 %v2087, 1.0
    %v2091 = vadd.f32 %v2089, 1.0
    %v2092 = vrcp.pop %v2090
    %v2093 = vmul.f32 1.0, %v2092
    %v2094 = vrcp.pop %v2091
    %v2095 = vmul.f32 1.0, %v2094
    %v2096 = vmul.f32 %v2095, 2.0
    %v2097 = vsub.f32 %v2096, 1.0
    %v2098 = vmul.f32 %v2093, %v2003
    %v2099 = vmul.f32 %v2093, %v2097
    %2101 = vrot.lane.b32.xlu0 %v2099, 64
    %v2102 = vpop.permute.xlu0 %2101
    %v2104 = vadd.f32 %v2098, %v2102
    %v2105 = vtanh.pop %v2104
    %v2106 = vmul.f32 %v2095, %v2105
    %v2107 = vld [vmem:[%s3] sm:$0xff]
    %v2108 = vld [vmem:[%s3 + $0x8] sm:$0xff]
    %v2109 = vld [vmem:[%s3 + $0x10] sm:$0xff]
    %v2110 = vld [vmem:[%s3 + $0x18] sm:$0xff]
    %v2111 = vld [vmem:[%s3 + $0x20] sm:$0xff]
    %v2112 = vld [vmem:[%s3 + $0x28] sm:$0xff]
    %v2113 = vld [vmem:[%s3 + $0x30] sm:$0xff]
    %v2114 = vld [vmem:[%s3 + $0x38] sm:$0xff]
    %v2115 = vld [vmem:[%s3 + $0x40] sm:$0xff]
    %v2116 = vld [vmem:[%s3 + $0x48] sm:$0xff]
    %v2117 = vld [vmem:[%s3 + $0x50] sm:$0x1]
    %v2118 = vld [vmem:[%s3 + $0x51] sm:$0x1]
    %v2119 = vld [vmem:[%s3 + $0x52] sm:$0x1]
    %v2120 = vld [vmem:[%s1] sm:$0xff]
    %vm2121 = vcmask 130048
    %v2123 = vsel %vm2121, %v2120, 0
    %2125 = vmatprep.subr.mxu0 0.0
    %2126 = vmatpush1.msra.mxu0 %v2115
    %2127 = vmatprep.subr.mxu0 0.0
    %2128 = vmatpush1.msra.mxu0 %v2116
    %2129 = vmatprep.subr.mxu0 0.0
    %2130 = vmatpush1.msra.mxu0 0.0
    %2131 = vmatprep.subr.mxu0 0.0
    %2132 = vmatpush1.msra.mxu0 0.0
    %2133 = vmatprep.subr.mxu0 0.0
    %2134 = vmatpush1.msra.mxu0 0.0
    %2135 = vmatprep.subr.mxu0 0.0
    %2136 = vmatpush1.msra.mxu0 0.0
    %2137 = vmatprep.subr.mxu0 0.0
    %2138 = vmatpush1.msra.mxu0 0.0
    %2139 = vmatprep.subr.mxu0 0.0
    %2140 = vmatpush1.msra.mxu0 0.0
    %2141 = vmatprep.subr.mxu0 0.0
    %2142 = vmatpush1.msra.mxu0 0.0
    %2143 = vmatprep.subr.mxu0 0.0
    %2144 = vmatpush1.msra.mxu0 0.0
    %2145 = vmatprep.subr.mxu0 0.0
    %2146 = vmatpush1.msra.mxu0 0.0
    %2147 = vmatprep.subr.mxu0 0.0
    %2148 = vmatpush1.msra.mxu0 0.0
    %2149 = vmatprep.subr.mxu0 0.0
    %2150 = vmatpush1.msra.mxu0 0.0
    %2151 = vmatprep.subr.mxu0 0.0
    %2152 = vmatpush1.msra.mxu0 0.0
    %2153 = vmatprep.subr.mxu0 0.0
    %2154 = vmatpush1.msra.mxu0 0.0
    %2155 = vmatprep.subr.mxu0 0.0
    %2156 = vmatpush1.msra.mxu0 0.0
    %2157 = vmatprep.subr.mxu0 0.0
    %2158 = vmatpush1.msra.mxu0 0.0
    %2159 = vmatprep.subr.mxu0 0.0
    %2160 = vmatpush1.msra.mxu0 0.0
    %2161 = vmatprep.subr.mxu0 0.0
    %2162 = vmatpush1.msra.mxu0 0.0
    %2163 = vmatprep.subr.mxu0 0.0
    %2164 = vmatpush1.msra.mxu0 0.0
    %2165 = vmatprep.subr.mxu0 0.0
    %2166 = vmatpush1.msra.mxu0 0.0
    %2167 = vmatprep.subr.mxu0 0.0
    %2168 = vmatpush1.msra.mxu0 0.0
    %2169 = vmatprep.subr.mxu0 0.0
    %2170 = vmatpush1.msra.mxu0 0.0
    %2171 = vmatprep.subr.mxu0 0.0
    %2172 = vmatpush1.msra.mxu0 0.0
    %2173 = vmatprep.subr.mxu0 0.0
    %2174 = vmatpush1.msra.mxu0 0.0
    %2175 = vmatprep.subr.mxu0 0.0
    %2176 = vmatpush1.msra.mxu0 0.0
    %2177 = vmatprep.subr.mxu0 0.0
    %2178 = vmatpush1.msra.mxu0 0.0
    %2179 = vmatprep.subr.mxu0 0.0
    %2180 = vmatpush1.msra.mxu0 0.0
    %2181 = vmatprep.subr.mxu0 0.0
    %2182 = vmatpush1.msra.mxu0 0.0
    %2183 = vmatprep.subr.mxu0 0.0
    %2184 = vmatpush1.msra.mxu0 0.0
    %2185 = vmatprep.subr.mxu0 0.0
    %2186 = vmatpush1.msra.mxu0 0.0
    %2187 = vmatprep.subr.mxu0 0.0
    %2188 = vmatpush1.msra.mxu0 0.0
    %2189 = vmatprep.mubr.f32.mxu0 0.0
    %2190 = vmatmul.mubr.f32.gmra.mrb[0].mxu0 %v2123
    %v2191 = vpop.f32.mrb[0].mxu0
    %v2192 = vadd.f32 0.0, %v2191
    %v2193 = vpop.f32.mrb[0].mxu0
    %2194 = vdwg.mxu0
    %2196 = vrot.lane.b32.xlu0 %v2106, 64
    %v2197 = vpop.permute.xlu0 %2196
    %v2198 = vsel %vm368, %v2197, 0
    %2200 = vmatprep.subr.mxu0 0.0
    %2201 = vmatpush1.msra.mxu0 %v2107
    %2202 = vmatprep.subr.mxu0 0.0
    %2203 = vmatpush1.msra.mxu0 %v2108
    %2204 = vmatprep.subr.mxu0 0.0
    %2205 = vmatpush1.msra.mxu0 %v2109
    %2206 = vmatprep.subr.mxu0 0.0
    %2207 = vmatpush1.msra.mxu0 %v2110
    %2208 = vmatprep.subr.mxu0 0.0
    %2209 = vmatpush1.msra.mxu0 %v2111
    %2210 = vmatprep.subr.mxu0 0.0
    %2211 = vmatpush1.msra.mxu0 %v2112
    %2212 = vmatprep.subr.mxu0 0.0
    %2213 = vmatpush1.msra.mxu0 %v2113
    %2214 = vmatprep.subr.mxu0 0.0
    %2215 = vmatpush1.msra.mxu0 %v2114
    %2216 = vmatprep.subr.mxu0 0.0
    %2217 = vmatpush1.msra.mxu0 0.0
    %2218 = vmatprep.subr.mxu0 0.0
    %2219 = vmatpush1.msra.mxu0 0.0
    %2220 = vmatprep.subr.mxu0 0.0
    %2221 = vmatpush1.msra.mxu0 0.0
    %2222 = vmatprep.subr.mxu0 0.0
    %2223 = vmatpush1.msra.mxu0 0.0
    %2224 = vmatprep.subr.mxu0 0.0
    %2225 = vmatpush1.msra.mxu0 0.0
    %2226 = vmatprep.subr.mxu0 0.0
    %2227 = vmatpush1.msra.mxu0 0.0
    %2228 = vmatprep.subr.mxu0 0.0
    %2229 = vmatpush1.msra.mxu0 0.0
    %2230 = vmatprep.subr.mxu0 0.0
    %2231 = vmatpush1.msra.mxu0 0.0
    %2232 = vmatprep.subr.mxu0 0.0
    %2233 = vmatpush1.msra.mxu0 0.0
    %2234 = vmatprep.subr.mxu0 0.0
    %2235 = vmatpush1.msra.mxu0 0.0
    %2236 = vmatprep.subr.mxu0 0.0
    %2237 = vmatpush1.msra.mxu0 0.0
    %2238 = vmatprep.subr.mxu0 0.0
    %2239 = vmatpush1.msra.mxu0 0.0
    %2240 = vmatprep.subr.mxu0 0.0
    %2241 = vmatpush1.msra.mxu0 0.0
    %2242 = vmatprep.subr.mxu0 0.0
    %2243 = vmatpush1.msra.mxu0 0.0
    %2244 = vmatprep.subr.mxu0 0.0
    %2245 = vmatpush1.msra.mxu0 0.0
    %2246 = vmatprep.subr.mxu0 0.0
    %2247 = vmatpush1.msra.mxu0 0.0
    %2248 = vmatprep.subr.mxu0 0.0
    %2249 = vmatpush1.msra.mxu0 0.0
    %2250 = vmatprep.subr.mxu0 0.0
    %2251 = vmatpush1.msra.mxu0 0.0
    %2252 = vmatprep.subr.mxu0 0.0
    %2253 = vmatpush1.msra.mxu0 0.0
    %2254 = vmatprep.subr.mxu0 0.0
    %2255 = vmatpush1.msra.mxu0 0.0
    %2256 = vmatprep.subr.mxu0 0.0
    %2257 = vmatpush1.msra.mxu0 0.0
    %2258 = vmatprep.subr.mxu0 0.0
    %2259 = vmatpush1.msra.mxu0 0.0
    %2260 = vmatprep.subr.mxu0 0.0
    %2261 = vmatpush1.msra.mxu0 0.0
    %2262 = vmatprep.subr.mxu0 0.0
    %2263 = vmatpush1.msra.mxu0 0.0
    %2264 = vmatprep.mubr.f32.mxu0 0.0
    %2265 = vmatmul.mubr.f32.gmra.mrb[0].mxu0 %v2198
    %v2266 = vpop.f32.mrb[0].mxu0
    %v2267 = vadd.f32 %v2192, %v2266
    %v2268 = vpop.f32.mrb[0].mxu0
    %2269 = vdwg.mxu0
    %v2270 = vlaneseq
    %v2271 = vshrl.u32 %v2270, 7
    %v2272 = vsub.s32 0, %v2271
    %v2273 = vrot.slane %v2118, %v2272
    %v2274 = vadd.f32 %v2267, %v2273
    %v2275 = vmax.f32 %v2274, 0.0
    %v2276 = vlaneseq
    %v2277 = vshrl.u32 %v2276, 7
    %v2278 = vsub.s32 0, %v2277
    %v2279 = vrot.slane %v2117, %v2278
    %v2280 = vmul.f32 %v2275, %v2279
    %v2281 = vsel %vm368, %v2280, 0.0
    %2282 = vadd.xlane.f32.xlu0 %v2281
    %v2283 = vpop.xlane.xlu0 %2282
    %v2284 = vlaneseq
    %v2285 = vshrl.u32 %v2284, 7
    %v2286 = vsub.s32 0, %v2285
    %v2287 = vrot.slane %v2119, %v2286
    %v2288 = vadd.f32 %v2283, %v2287
    %v2289 = vxor.u32 %v2288, 2147483648
    %v2290 = vmul.f32 %v2289, 1.442695
    %v2291 = vpow.pop %v2290
    %v2292 = vadd.f32 %v2291, 1.0
    %v2293 = vrcp.pop %v2292
    %v2294 = vmul.f32 1.0, %v2293
    %v2295 = vmax.f32 %v2294, 1e-07
    %v2296 = vmin.f32 %v2295, 0.9999999
    %vm2297 = vcmask 7168
    %2298 = vst.msk [vmem:[%s4] sm:$0xff] %vm2297, %v2296
    // Predicated region
    $region22: #{stock_lstm_forward.1} parent=1 // pred_check
      _
    $region23: #{stock_lstm_forward.1} parent=1 // pred_check_branch
      %2300 = sbr.rel (0) target = $region25
    $region24: #{stock_lstm_forward.1} parent=1 // pred_region
      _
    $region25: #{stock_lstm_forward.1} parent=1 // pred_fallthru
      _
    // Predicated region
    $region26: #{stock_lstm_forward.1} parent=1 // pred_check
      _
    $region27: #{stock_lstm_forward.1} parent=1 // pred_check_branch
      %2302 = sbr.rel (0) target = $region29
    $region28: #{stock_lstm_forward.1} parent=1 // pred_region
      _
    $region29: #{stock_lstm_forward.1} parent=1 // pred_fallthru
      _
    %2303 = vsyncpa [#allocation3], 1

</llo_original>
